<compile_context>
chip_gen: v6e
topology: v6e:2x2x1
jax: 0.10.0
libtpu: 0.0.40
codegen_flags: <defaults>
</compile_context>

<pallas_src>
import functools

import jax
import jax.numpy as jnp
from jax.experimental import pallas as pl
from jax.experimental.pallas import tpu as pltpu


# ----------------------------------------------------------------------------
# In-kernel exact GELU (erf via Abramowitz-Stegun 7.1.26, |err| < 1.5e-7;
# only exp / abs / where, all cheap EUP/VPU ops).
# ----------------------------------------------------------------------------
def _erf(x):
    z = jnp.abs(x)
    t = 1.0 / (1.0 + 0.3275911 * z)
    poly = t * (0.254829592 + t * (-0.284496736 + t * (1.421413741
                + t * (-1.453152027 + t * 1.061405429))))
    pos = 1.0 - poly * jnp.exp(-z * z)
    return jnp.where(x < 0, -pos, pos)


def _gelu(x):
    # torch nn.GELU() default (erf form)
    return 0.5 * x * (1.0 + _erf(x * 0.7071067811865476))


# ----------------------------------------------------------------------------
# Kernel 1: conv3x3(s=1) GEMM + bias + GELU + per-sample partial GroupNorm stats
# ----------------------------------------------------------------------------
def _conv1_kernel(a_ref, w_ref, bias_ref, y_ref, ssum_ref, ssq_ref):
    # a_ref   : (1, T_SP, K1) bf16   one spatial block of one sample
    # w_ref   : (K1, N)       bf16
    # bias_ref: (1, N)        f32
    # y_ref   : (1, T_SP, N)  bf16
    # ssum/ssq: (1, 8, N)     f32    resident accumulators across the sp axis
    sp = pl.program_id(1)

    acc = jnp.dot(a_ref[0], w_ref[...], preferred_element_type=jnp.float32)
    y = _gelu(acc + bias_ref[...])                       # (T_SP, N) f32
    y_ref[0] = y.astype(y_ref.dtype)

    n = y.shape[-1]
    part_sum = jnp.sum(y.reshape(-1, 8, n), axis=0)      # (8, N) f32
    part_sq = jnp.sum((y * y).reshape(-1, 8, n), axis=0)

    @pl.when(sp == 0)
    def _init():
        ssum_ref[...] = jnp.zeros_like(ssum_ref)
        ssq_ref[...] = jnp.zeros_like(ssq_ref)

    ssum_ref[...] += part_sum[None]
    ssq_ref[...] += part_sq[None]


# ----------------------------------------------------------------------------
# Kernel 2: conv3x3(stride s) GEMM + fused 1x1-conv path1 + (b2 + b1) bias
# ----------------------------------------------------------------------------
def _conv2_kernel_single(col_ref, a1_ref, wB_ref, w1_ref, bias_ref, o_ref):
    acc = jnp.dot(col_ref[...], wB_ref[...], preferred_element_type=jnp.float32)
    acc += jnp.dot(a1_ref[...], w1_ref[...], preferred_element_type=jnp.float32)
    o_ref[...] = acc + bias_ref[...]


def _conv2_kernel_ksplit(col_ref, a1_ref, wB_ref, w1_ref, bias_ref, o_ref):
    # Accumulate directly into the f32 output block (k-invariant index),
    # no scratch accumulator.
    @pl.when(pl.program_id(1) == 0)
    def _init():
        o_ref[...] = (jnp.dot(a1_ref[...], w1_ref[...],
                              preferred_element_type=jnp.float32)
                      + bias_ref[...])

    o_ref[...] += jnp.dot(col_ref[...], wB_ref[...],
                          preferred_element_type=jnp.float32)


# ----------------------------------------------------------------------------
# Helpers
# ----------------------------------------------------------------------------
def _round_up(v, m):
    return -(-v // m) * m


def _pick_tile(total, cap, mult=8, min_blocks=1):
    """Largest t: t % mult == 0, total % t == 0, t <= cap, total // t >= min_blocks."""
    best = None
    t = mult
    limit = min(total, max(cap, mult))
    while t <= limit:
        if total % t == 0 and total // t >= min_blocks:
            best = t
        t += mult
    if best is None:
        best = mult
    return best


def _vmem_limit():
    try:
        cap = int(getattr(pltpu.get_tpu_info(), "vmem_capacity_bytes", 0))
    except Exception:
        cap = 0
    if cap <= 0:
        cap = 64 * 1024 * 1024
    return max(32 * 1024 * 1024, min(96 * 1024 * 1024, (cap * 3) // 4))


def _im2col_3x3(x_nhwc, stride, k_total=None):
    """im2col for k=3, pad=1.  Returns (B, Ho*Wo, k_total or 9*C), tap-major /
    channel-minor.  Optional K zero-tail is baked into the single concatenate
    so the col tensor is materialized exactly once at its final width."""
    B, H, W, C = x_nhwc.shape
    Ho = (H - 1) // stride + 1
    Wo = (W - 1) // stride + 1
    xp = jnp.pad(x_nhwc, ((0, 0), (1, 1), (1, 1), (0, 0)))
    taps = []
    for i in range(3):
        for j in range(3):
            taps.append(jax.lax.slice(
                xp, (0, i, j, 0),
                (B, i + stride * (Ho - 1) + 1, j + stride * (Wo - 1) + 1, C),
                (1, stride, stride, 1)))
    if k_total is not None and k_total > 9 * C:
        taps.append(jnp.zeros((B, Ho, Wo, k_total - 9 * C), x_nhwc.dtype))
    col = jnp.concatenate(taps, axis=-1)
    return col.reshape(B, Ho * Wo, col.shape[-1])


# ----------------------------------------------------------------------------
# Pallas wrappers
# ----------------------------------------------------------------------------
def conv1_gelu_stats(x_nhwc, w, b):
    """conv3x3(stride 1, pad 1) + bias + GELU, returning bf16 y (B, H*W, Cout)
    plus per-sample f32 partial sums / sums-of-squares for GroupNorm(1, C)."""
    B, H, W, Cin = x_nhwc.shape
    Cout = w.shape[0]
    HW = H * W
    K1 = 9 * Cin
    assert HW % 8 == 0, "TODO(synk): mask partial rows when H*W % 8 != 0"

    col = _im2col_3x3(x_nhwc, 1)                                  # (B, HW, K1) bf16
    wA = jnp.transpose(w, (2, 3, 1, 0)).reshape(K1, Cout).astype(jnp.bfloat16)
    bias = b.reshape(1, Cout).astype(jnp.float32)

    # Spatial tile: largest divisor of H*W keeping the A block under ~4 MiB.
    cap = max(8, min(2048, (4 * 1024 * 1024) // (2 * K1)))
    t_sp = _pick_tile(HW, cap, 8)
    grid = (B, HW // t_sp)

    y, ssum, ssq = pl.pallas_call(
        _conv1_kernel,
        out_shape=(jax.ShapeDtypeStruct((B, HW, Cout), jnp.bfloat16),
                   jax.ShapeDtypeStruct((B, 8, Cout), jnp.float32),
                   jax.ShapeDtypeStruct((B, 8, Cout), jnp.float32)),
        grid_spec=pltpu.PrefetchScalarGridSpec(
            num_scalar_prefetch=0,
            grid=grid,
            in_specs=[pl.BlockSpec((1, t_sp, K1), lambda bi, si: (bi, si, 0)),
                      pl.BlockSpec((K1, Cout), lambda bi, si: (0, 0)),
                      pl.BlockSpec((1, Cout), lambda bi, si: (0, 0))],
            out_specs=[pl.BlockSpec((1, t_sp, Cout), lambda bi, si: (bi, si, 0)),
                       pl.BlockSpec((1, 8, Cout), lambda bi, si: (bi, 0, 0)),
                       pl.BlockSpec((1, 8, Cout), lambda bi, si: (bi, 0, 0))]),
        compiler_params=pltpu.CompilerParams(
            dimension_semantics=("parallel", "arbitrary"),
            vmem_limit_bytes=_vmem_limit()),
    )(col, wA, bias)
    return y, ssum, ssq


def conv2_plus_path1(y_nhwc, x_nhwc, w2, b2, w1, b1, stride):
    """conv3x3(stride s, pad 1) on y  +  conv1x1(stride s) on x  +  (b2 + b1),
    all inside one GEMM kernel.  Returns (B*Ho*Wo, Cout) f32."""
    B, H, W, Cmid = y_nhwc.shape
    Cin = x_nhwc.shape[-1]
    Cout = w2.shape[0]
    Ho = (H - 1) // stride + 1
    Wo = (W - 1) // stride + 1
    M = B * Ho * Wo
    K2 = 9 * Cmid

    # Single resident K block when small enough; otherwise split K and
    # accumulate straight into the f32 output.
    if K2 <= 2048:
        tk, k2p = K2, K2
    else:
        tk = 512
        k2p = _round_up(K2, tk)

    col = _im2col_3x3(y_nhwc, stride, k2p).reshape(M, k2p)        # bf16
    a1 = x_nhwc[:, ::stride, ::stride, :].reshape(M, Cin)         # bf16

    wB = jnp.transpose(w2, (2, 3, 1, 0)).reshape(K2, Cout).astype(jnp.bfloat16)
    if k2p > K2:
        wB = jnp.pad(wB, ((0, k2p - K2), (0, 0)))
    w1m = jnp.transpose(w1.reshape(Cout, Cin)).astype(jnp.bfloat16)
    bias = (b2 + b1).reshape(1, Cout).astype(jnp.float32)

    mp = _round_up(M, 8)
    if mp > M:                                                    # rare; sliced off below
        col = jnp.pad(col, ((0, mp - M), (0, 0)))
        a1 = jnp.pad(a1, ((0, mp - M), (0, 0)))

    cap = max(8, min(2048, (4 * 1024 * 1024) // (2 * k2p)))
    min_blocks = 2 if mp >= 256 else 1          # give v7x megacore 2+ M blocks
    tm = _pick_tile(mp, cap, 8, min_blocks)
    n_i, n_k = mp // tm, k2p // tk

    if n_k == 1:
        grid = (n_i,)
        in_specs = [pl.BlockSpec((tm, k2p), lambda i: (i, 0)),
                    pl.BlockSpec((tm, Cin), lambda i: (i, 0)),
                    pl.BlockSpec((k2p, Cout), lambda i: (0, 0)),
                    pl.BlockSpec((Cin, Cout), lambda i: (0, 0)),
                    pl.BlockSpec((1, Cout), lambda i: (0, 0))]
        out_spec = pl.BlockSpec((tm, Cout), lambda i: (i, 0))
        kernel = _conv2_kernel_single
        sem = ("parallel",)
    else:
        grid = (n_i, n_k)
        in_specs = [pl.BlockSpec((tm, tk), lambda i, k: (i, k)),
                    pl.BlockSpec((tm, Cin), lambda i, k: (i, 0)),
                    pl.BlockSpec((tk, Cout), lambda i, k: (k, 0)),
                    pl.BlockSpec((Cin, Cout), lambda i, k: (0, 0)),
                    pl.BlockSpec((1, Cout), lambda i, k: (0, 0))]
        out_spec = pl.BlockSpec((tm, Cout), lambda i, k: (i, 0))
        kernel = _conv2_kernel_ksplit
        sem = ("parallel", "arbitrary")

    out = pl.pallas_call(
        kernel,
        out_shape=jax.ShapeDtypeStruct((mp, Cout), jnp.float32),
        grid_spec=pltpu.PrefetchScalarGridSpec(
            num_scalar_prefetch=0, grid=grid,
            in_specs=in_specs, out_specs=out_spec),
        compiler_params=pltpu.CompilerParams(
            dimension_semantics=sem, vmem_limit_bytes=_vmem_limit()),
    )(col, a1, wB, w1m, bias)
    return out[:M] if mp > M else out


# ----------------------------------------------------------------------------
# ResNetBlock forward (matches the PyTorch module semantics)
# ----------------------------------------------------------------------------
def resnet_block_forward(x, p, stride=1):
    """x: (B, Cin, H, W) f32 NCHW -> (B, Cout, Ho, Wo) f32."""
    B, Cin, H, W = x.shape
    Cout = p['p1_w'].shape[0]
    Ho = (H - 1) // stride + 1
    Wo = (W - 1) // stride + 1

    # Channel-last bf16 once: every GEMM operand is lane-dense and half-width.
    x_nhwc = jnp.transpose(x, (0, 2, 3, 1)).astype(jnp.bfloat16)

    # conv3x3(s=1) + bias + GELU + per-sample partial stats (one pallas_call)
    y, ssum, ssq = conv1_gelu_stats(x_nhwc, p['c1_w'], p['c1_b'])

    # GroupNorm(1, C): tiny per-sample stat combine + one fused normalize pass.
    cnt = float(H * W * Cout)
    mu = jnp.sum(ssum, axis=(1, 2)) / cnt                         # (B,)
    var = jnp.sum(ssq, axis=(1, 2)) / cnt - mu * mu
    inv = jax.lax.rsqrt(var + 1e-5)
    yn = ((y.astype(jnp.float32) - mu[:, None, None]) * inv[:, None, None]
          * p['gn_w'][None, None, :] + p['gn_b'][None, None, :])
    y_nhwc = yn.reshape(B, H, W, Cout).astype(jnp.bfloat16)

    # conv3x3(stride s) + fused 1x1 path1 + both biases (one pallas_call)
    out = conv2_plus_path1(y_nhwc, x_nhwc, p['c2_w'], p['c2_b'],
                           p['p1_w'], p['p1_b'], stride)

    return jnp.transpose(out.reshape(B, Ho, Wo, Cout), (0, 3, 1, 2))


# ----------------------------------------------------------------------------
# Plain-JAX f32 reference for validation
# ----------------------------------------------------------------------------
def _conv_ref(x, w, b, stride, pad):
    y = jax.lax.conv_general_dilated(
        x, w, (stride, stride), [(pad, pad), (pad, pad)],
        dimension_numbers=('NCHW', 'OIHW', 'NCHW'))
    return y + b[None, :, None, None]


def resnet_block_ref(x, p, stride=1):
    x1 = _conv_ref(x, p['p1_w'], p['p1_b'], stride, 0)
    y = jax.nn.gelu(_conv_ref(x, p['c1_w'], p['c1_b'], 1, 1), approximate=False)
    mu = y.mean(axis=(1, 2, 3), keepdims=True)
    var = jnp.mean(jnp.square(y - mu), axis=(1, 2, 3), keepdims=True)
    y = ((y - mu) * jax.lax.rsqrt(var + 1e-5)
         * p['gn_w'][None, :, None, None] + p['gn_b'][None, :, None, None])
    x2 = _conv_ref(y, p['c2_w'], p['c2_b'], stride, 1)
    return x1 + x2


# ----------------------------------------------------------------------------
# Deterministic synthetic parameters
# ----------------------------------------------------------------------------
def build_params(key, cin, cout):
    ks = jax.random.split(key, 8)

    def w(k, shape, fan_in):
        return jax.random.normal(k, shape, jnp.float32) / jnp.sqrt(float(fan_in))

    return {
        'p1_w': w(ks[0], (cout, cin, 1, 1), cin),
        'p1_b': 0.01 * jax.random.normal(ks[1], (cout,), jnp.float32),
        'c1_w': w(ks[2], (cout, cin, 3, 3), cin * 9),
        'c1_b': 0.01 * jax.random.normal(ks[3], (cout,), jnp.float32),
        'gn_w': 1.0 + 0.1 * jax.random.normal(ks[4], (cout,), jnp.float32),
        'gn_b': 0.01 * jax.random.normal(ks[5], (cout,), jnp.float32),
        'c2_w': w(ks[6], (cout, cout, 3, 3), cout * 9),
        'c2_b': 0.01 * jax.random.normal(ks[7], (cout,), jnp.float32),
    }


if __name__ == "__main__":
    B, CIN, COUT, H, W = 2, 4, 8, 16, 16
    key = jax.random.PRNGKey(0)
    kx, kp = jax.random.split(key)
    x = jax.random.normal(kx, (B, CIN, H, W), jnp.float32)
    params = build_params(kp, CIN, COUT)

    for stride in (1, 2):
        fwd = jax.jit(functools.partial(resnet_block_forward, stride=stride))
        out = jax.block_until_ready(fwd(x, params))

        ho = (H - 1) // stride + 1
        wo = (W - 1) // stride + 1
        assert out.shape == (B, COUT, ho, wo), out.shape
        assert bool(jnp.all(jnp.isfinite(out)))

        ref = resnet_block_ref(x, params, stride)
        err = float(jnp.max(jnp.abs(out - ref)))
        scale = float(jnp.max(jnp.abs(ref))) + 1e-6
        # bf16 MXU operands / bf16 y intermediate vs f32 reference.
        assert err <= 5e-2 * scale + 5e-2, (stride, err, scale)

    print("KERNEL_OK")
</pallas_src>

<mosaic_0001>
module attributes {stable_mosaic.version = 11 : i64} {
  func.func @_conv1_kernel(%arg0: i32, %arg1: i32, %arg2: memref<1x256x36xbf16, #tpu.memory_space<vmem>>, %arg3: memref<36x8xbf16, #tpu.memory_space<vmem>>, %arg4: memref<1x8xf32, #tpu.memory_space<vmem>>, %arg5: memref<1x256x8xbf16, #tpu.memory_space<vmem>>, %arg6: memref<1x8x8xf32, #tpu.memory_space<vmem>>, %arg7: memref<1x8x8xf32, #tpu.memory_space<vmem>>) attributes {dimension_semantics = [#tpu.dimension_semantics<parallel>, #tpu.dimension_semantics<arbitrary>], iteration_bounds = array<i64: 2, 1>, scalar_prefetch = 0 : i64, scratch_operands = 0 : i64, tpu.core_type = #tpu.core_type<tc>, window_params = [{transform_indices = @transform_0, window_bounds = array<i64: 1, 256, 36>}, {pipeline_mode = #tpu.pipeline_mode<synchronous>, transform_indices = @transform_1, window_bounds = array<i64: 36, 8>}, {pipeline_mode = #tpu.pipeline_mode<synchronous>, transform_indices = @transform_2, window_bounds = array<i64: 1, 8>}, {transform_indices = @transform_3, window_bounds = array<i64: 1, 256, 8>}, {transform_indices = @transform_4, window_bounds = array<i64: 1, 8, 8>}, {transform_indices = @transform_5, window_bounds = array<i64: 1, 8, 8>}]} {
    %c0 = arith.constant 0 : index
    %c0_0 = arith.constant 0 : index
    %c0_1 = arith.constant 0 : index
    %0 = vector.load %arg2[%c0, %c0_0, %c0_1] : memref<1x256x36xbf16, #tpu.memory_space<vmem>>, vector<1x256x36xbf16>
    %1 = vector.shape_cast %0 : vector<1x256x36xbf16> to vector<256x36xbf16>
    %c0_2 = arith.constant 0 : index
    %c0_3 = arith.constant 0 : index
    %2 = vector.load %arg3[%c0_2, %c0_3] : memref<36x8xbf16, #tpu.memory_space<vmem>>, vector<36x8xbf16>
    %cst = arith.constant dense<0.000000e+00> : vector<256x8xf32>
    %3 = tpu.matmul %1, %2, %cst {dimension_numbers = #tpu.dot_dimension_numbers<[1], [0], [0], [1], [0, 0, 1, 1], [], []>} : vector<256x36xbf16>, vector<36x8xbf16>, vector<256x8xf32> -> vector<256x8xf32>
    %c0_4 = arith.constant 0 : index
    %c0_5 = arith.constant 0 : index
    %4 = vector.load %arg4[%c0_4, %c0_5] : memref<1x8xf32, #tpu.memory_space<vmem>>, vector<1x8xf32>
    %5 = vector.broadcast %4 : vector<1x8xf32> to vector<256x8xf32>
    %6 = arith.addf %3, %5 : vector<256x8xf32>
    %cst_6 = arith.constant 5.000000e-01 : f32
    %7 = vector.broadcast %cst_6 : f32 to vector<256x8xf32>
    %8 = arith.mulf %7, %6 : vector<256x8xf32>
    %cst_7 = arith.constant 0.707106769 : f32
    %9 = vector.broadcast %cst_7 : f32 to vector<256x8xf32>
    %10 = arith.mulf %6, %9 : vector<256x8xf32>
    %11 = math.absf %10 : vector<256x8xf32>
    %cst_8 = arith.constant 0.327591091 : f32
    %12 = vector.broadcast %cst_8 : f32 to vector<256x8xf32>
    %13 = arith.mulf %12, %11 : vector<256x8xf32>
    %cst_9 = arith.constant 1.000000e+00 : f32
    %14 = vector.broadcast %cst_9 : f32 to vector<256x8xf32>
    %15 = arith.addf %14, %13 : vector<256x8xf32>
    %cst_10 = arith.constant 1.000000e+00 : f32
    %16 = vector.broadcast %cst_10 : f32 to vector<256x8xf32>
    %17 = arith.divf %16, %15 : vector<256x8xf32>
    %cst_11 = arith.constant 1.06140542 : f32
    %18 = vector.broadcast %cst_11 : f32 to vector<256x8xf32>
    %19 = arith.mulf %17, %18 : vector<256x8xf32>
    %cst_12 = arith.constant -1.45315206 : f32
    %20 = vector.broadcast %cst_12 : f32 to vector<256x8xf32>
    %21 = arith.addf %20, %19 : vector<256x8xf32>
    %22 = arith.mulf %17, %21 : vector<256x8xf32>
    %cst_13 = arith.constant 1.42141378 : f32
    %23 = vector.broadcast %cst_13 : f32 to vector<256x8xf32>
    %24 = arith.addf %23, %22 : vector<256x8xf32>
    %25 = arith.mulf %17, %24 : vector<256x8xf32>
    %cst_14 = arith.constant -0.284496725 : f32
    %26 = vector.broadcast %cst_14 : f32 to vector<256x8xf32>
    %27 = arith.addf %26, %25 : vector<256x8xf32>
    %28 = arith.mulf %17, %27 : vector<256x8xf32>
    %cst_15 = arith.constant 0.254829586 : f32
    %29 = vector.broadcast %cst_15 : f32 to vector<256x8xf32>
    %30 = arith.addf %29, %28 : vector<256x8xf32>
    %31 = arith.mulf %17, %30 : vector<256x8xf32>
    %cst_16 = arith.constant 0.000000e+00 : f32
    %32 = vector.broadcast %cst_16 : f32 to vector<256x8xf32>
    %33 = arith.subf %32, %11 : vector<256x8xf32>
    %34 = arith.mulf %33, %11 : vector<256x8xf32>
    %35 = math.exp %34 : vector<256x8xf32>
    %36 = arith.mulf %31, %35 : vector<256x8xf32>
    %cst_17 = arith.constant 1.000000e+00 : f32
    %37 = vector.broadcast %cst_17 : f32 to vector<256x8xf32>
    %38 = arith.subf %37, %36 : vector<256x8xf32>
    %cst_18 = arith.constant 0.000000e+00 : f32
    %39 = vector.broadcast %cst_18 : f32 to vector<256x8xf32>
    %40 = arith.cmpf olt, %10, %39 : vector<256x8xf32>
    %cst_19 = arith.constant 0.000000e+00 : f32
    %41 = vector.broadcast %cst_19 : f32 to vector<256x8xf32>
    %42 = arith.subf %41, %38 : vector<256x8xf32>
    %43 = arith.select %40, %42, %38 : vector<256x8xi1>, vector<256x8xf32>
    %cst_20 = arith.constant 1.000000e+00 : f32
    %44 = vector.broadcast %cst_20 : f32 to vector<256x8xf32>
    %45 = arith.addf %44, %43 : vector<256x8xf32>
    %46 = arith.mulf %8, %45 : vector<256x8xf32>
    %47 = arith.truncf %46 : vector<256x8xf32> to vector<256x8xbf16>
    %c0_21 = arith.constant 0 : index
    %c0_22 = arith.constant 0 : index
    %c0_23 = arith.constant 0 : index
    %48 = vector.load %arg5[%c0_21, %c0_22, %c0_23] : memref<1x256x8xbf16, #tpu.memory_space<vmem>>, vector<1x256x8xbf16>
    %49 = vector.shape_cast %48 : vector<1x256x8xbf16> to vector<256x8xbf16>
    %50 = vector.shape_cast %47 : vector<256x8xbf16> to vector<1x256x8xbf16>
    tpu.vector_store %arg5[%c0_21, %c0_22, %c0_23], %50 {strides = array<i32>} : memref<1x256x8xbf16, #tpu.memory_space<vmem>>, vector<1x256x8xbf16>,
    %51 = vector.shape_cast %46 : vector<256x8xf32> to vector<32x8x8xf32>
    %cst_24 = arith.constant dense<0.000000e+00> : vector<8x8xf32>
    %52 = vector.multi_reduction <add>, %51, %cst_24 [0] : vector<32x8x8xf32> to vector<8x8xf32>
    %53 = arith.mulf %46, %46 : vector<256x8xf32>
    %54 = vector.shape_cast %53 : vector<256x8xf32> to vector<32x8x8xf32>
    %cst_25 = arith.constant dense<0.000000e+00> : vector<8x8xf32>
    %55 = vector.multi_reduction <add>, %54, %cst_25 [0] : vector<32x8x8xf32> to vector<8x8xf32>
    %c0_i32 = arith.constant 0 : i32
    %56 = arith.cmpi eq, %arg1, %c0_i32 : i32
    %57 = arith.extui %56 : i1 to i32
    %c0_i32_26 = arith.constant 0 : i32
    %58 = arith.cmpi ne, %57, %c0_i32_26 : i32
    scf.if %58 {
      %cst_39 = arith.constant 0.000000e+00 : f32
      %67 = vector.broadcast %cst_39 : f32 to vector<1x8x8xf32>
      %c0_40 = arith.constant 0 : index
      %c0_41 = arith.constant 0 : index
      %c0_42 = arith.constant 0 : index
      %68 = vector.load %arg6[%c0_40, %c0_41, %c0_42] : memref<1x8x8xf32, #tpu.memory_space<vmem>>, vector<1x8x8xf32>
      tpu.vector_store %arg6[%c0_40, %c0_41, %c0_42], %67 {strides = array<i32>} : memref<1x8x8xf32, #tpu.memory_space<vmem>>, vector<1x8x8xf32>,
      %cst_43 = arith.constant 0.000000e+00 : f32
      %69 = vector.broadcast %cst_43 : f32 to vector<1x8x8xf32>
      %c0_44 = arith.constant 0 : index
      %c0_45 = arith.constant 0 : index
      %c0_46 = arith.constant 0 : index
      %70 = vector.load %arg7[%c0_44, %c0_45, %c0_46] : memref<1x8x8xf32, #tpu.memory_space<vmem>>, vector<1x8x8xf32>
      tpu.vector_store %arg7[%c0_44, %c0_45, %c0_46], %69 {strides = array<i32>} : memref<1x8x8xf32, #tpu.memory_space<vmem>>, vector<1x8x8xf32>,
    } else {
    }
    %c0_27 = arith.constant 0 : index
    %c0_28 = arith.constant 0 : index
    %c0_29 = arith.constant 0 : index
    %59 = vector.load %arg6[%c0_27, %c0_28, %c0_29] : memref<1x8x8xf32, #tpu.memory_space<vmem>>, vector<1x8x8xf32>
    %60 = vector.shape_cast %52 : vector<8x8xf32> to vector<1x8x8xf32>
    %61 = arith.addf %59, %60 : vector<1x8x8xf32>
    %c0_30 = arith.constant 0 : index
    %c0_31 = arith.constant 0 : index
    %c0_32 = arith.constant 0 : index
    %62 = vector.load %arg6[%c0_30, %c0_31, %c0_32] : memref<1x8x8xf32, #tpu.memory_space<vmem>>, vector<1x8x8xf32>
    tpu.vector_store %arg6[%c0_30, %c0_31, %c0_32], %61 {strides = array<i32>} : memref<1x8x8xf32, #tpu.memory_space<vmem>>, vector<1x8x8xf32>,
    %c0_33 = arith.constant 0 : index
    %c0_34 = arith.constant 0 : index
    %c0_35 = arith.constant 0 : index
    %63 = vector.load %arg7[%c0_33, %c0_34, %c0_35] : memref<1x8x8xf32, #tpu.memory_space<vmem>>, vector<1x8x8xf32>
    %64 = vector.shape_cast %55 : vector<8x8xf32> to vector<1x8x8xf32>
    %65 = arith.addf %63, %64 : vector<1x8x8xf32>
    %c0_36 = arith.constant 0 : index
    %c0_37 = arith.constant 0 : index
    %c0_38 = arith.constant 0 : index
    %66 = vector.load %arg7[%c0_36, %c0_37, %c0_38] : memref<1x8x8xf32, #tpu.memory_space<vmem>>, vector<1x8x8xf32>
    tpu.vector_store %arg7[%c0_36, %c0_37, %c0_38], %65 {strides = array<i32>} : memref<1x8x8xf32, #tpu.memory_space<vmem>>, vector<1x8x8xf32>,
    return
  }
  func.func @transform_0(%arg0: i32, %arg1: i32) -> (i32, i32, i32) {
    %c0_i32 = arith.constant 0 : i32
    %c0_i32_0 = arith.constant 0 : i32
    return %arg0, %arg1, %c0_i32 : i32, i32, i32
  }
  func.func @transform_1(%arg0: i32, %arg1: i32) -> (i32, i32) {
    %c0_i32 = arith.constant 0 : i32
    %c0_i32_0 = arith.constant 0 : i32
    %c0_i32_1 = arith.constant 0 : i32
    return %c0_i32, %c0_i32_0 : i32, i32
  }
  func.func @transform_2(%arg0: i32, %arg1: i32) -> (i32, i32) {
    %c0_i32 = arith.constant 0 : i32
    %c0_i32_0 = arith.constant 0 : i32
    %c0_i32_1 = arith.constant 0 : i32
    return %c0_i32, %c0_i32_0 : i32, i32
  }
  func.func @transform_3(%arg0: i32, %arg1: i32) -> (i32, i32, i32) {
    %c0_i32 = arith.constant 0 : i32
    %c0_i32_0 = arith.constant 0 : i32
    return %arg0, %arg1, %c0_i32 : i32, i32, i32
  }
  func.func @transform_4(%arg0: i32, %arg1: i32) -> (i32, i32, i32) {
    %c0_i32 = arith.constant 0 : i32
    %c0_i32_0 = arith.constant 0 : i32
    %c0_i32_1 = arith.constant 0 : i32
    return %arg0, %c0_i32, %c0_i32_0 : i32, i32, i32
  }
  func.func @transform_5(%arg0: i32, %arg1: i32) -> (i32, i32, i32) {
    %c0_i32 = arith.constant 0 : i32
    %c0_i32_0 = arith.constant 0 : i32
    %c0_i32_1 = arith.constant 0 : i32
    return %arg0, %c0_i32, %c0_i32_0 : i32, i32, i32
  }
}

module attributes {stable_mosaic.version = 11 : i64} {
  func.func @_conv2_kernel_single(%arg0: i32, %arg1: memref<256x72xbf16, #tpu.memory_space<vmem>>, %arg2: memref<256x4xbf16, #tpu.memory_space<vmem>>, %arg3: memref<72x8xbf16, #tpu.memory_space<vmem>>, %arg4: memref<4x8xbf16, #tpu.memory_space<vmem>>, %arg5: memref<1x8xf32, #tpu.memory_space<vmem>>, %arg6: memref<256x8xf32, #tpu.memory_space<vmem>>) attributes {dimension_semantics = [#tpu.dimension_semantics<parallel>], iteration_bounds = array<i64: 2>, scalar_prefetch = 0 : i64, scratch_operands = 0 : i64, tpu.core_type = #tpu.core_type<tc>, window_params = [{transform_indices = @transform_0, window_bounds = array<i64: 256, 72>}, {transform_indices = @transform_1, window_bounds = array<i64: 256, 4>}, {pipeline_mode = #tpu.pipeline_mode<synchronous>, transform_indices = @transform_2, window_bounds = array<i64: 72, 8>}, {pipeline_mode = #tpu.pipeline_mode<synchronous>, transform_indices = @transform_3, window_bounds = array<i64: 4, 8>}, {pipeline_mode = #tpu.pipeline_mode<synchronous>, transform_indices = @transform_4, window_bounds = array<i64: 1, 8>}, {transform_indices = @transform_5, window_bounds = array<i64: 256, 8>}]} {
    %c0 = arith.constant 0 : index
    %c0_0 = arith.constant 0 : index
    %0 = vector.load %arg1[%c0, %c0_0] : memref<256x72xbf16, #tpu.memory_space<vmem>>, vector<256x72xbf16>
    %c0_1 = arith.constant 0 : index
    %c0_2 = arith.constant 0 : index
    %1 = vector.load %arg3[%c0_1, %c0_2] : memref<72x8xbf16, #tpu.memory_space<vmem>>, vector<72x8xbf16>
    %cst = arith.constant dense<0.000000e+00> : vector<256x8xf32>
    %2 = tpu.matmul %0, %1, %cst {dimension_numbers = #tpu.dot_dimension_numbers<[1], [0], [0], [1], [0, 0, 1, 1], [], []>} : vector<256x72xbf16>, vector<72x8xbf16>, vector<256x8xf32> -> vector<256x8xf32>
    %c0_3 = arith.constant 0 : index
    %c0_4 = arith.constant 0 : index
    %3 = vector.load %arg2[%c0_3, %c0_4] : memref<256x4xbf16, #tpu.memory_space<vmem>>, vector<256x4xbf16>
    %c0_5 = arith.constant 0 : index
    %c0_6 = arith.constant 0 : index
    %4 = vector.load %arg4[%c0_5, %c0_6] : memref<4x8xbf16, #tpu.memory_space<vmem>>, vector<4x8xbf16>
    %cst_7 = arith.constant dense<0.000000e+00> : vector<256x8xf32>
    %5 = tpu.matmul %3, %4, %cst_7 {dimension_numbers = #tpu.dot_dimension_numbers<[1], [0], [0], [1], [0, 0, 1, 1], [], []>} : vector<256x4xbf16>, vector<4x8xbf16>, vector<256x8xf32> -> vector<256x8xf32>
    %6 = arith.addf %2, %5 : vector<256x8xf32>
    %c0_8 = arith.constant 0 : index
    %c0_9 = arith.constant 0 : index
    %7 = vector.load %arg5[%c0_8, %c0_9] : memref<1x8xf32, #tpu.memory_space<vmem>>, vector<1x8xf32>
    %8 = vector.broadcast %7 : vector<1x8xf32> to vector<256x8xf32>
    %9 = arith.addf %6, %8 : vector<256x8xf32>
    %c0_10 = arith.constant 0 : index
    %c0_11 = arith.constant 0 : index
    %10 = vector.load %arg6[%c0_10, %c0_11] : memref<256x8xf32, #tpu.memory_space<vmem>>, vector<256x8xf32>
    tpu.vector_store %arg6[%c0_10, %c0_11], %9 {strides = array<i32>} : memref<256x8xf32, #tpu.memory_space<vmem>>, vector<256x8xf32>,
    return
  }
  func.func @transform_0(%arg0: i32) -> (i32, i32) {
    %c0_i32 = arith.constant 0 : i32
    %c0_i32_0 = arith.constant 0 : i32
    return %arg0, %c0_i32 : i32, i32
  }
  func.func @transform_1(%arg0: i32) -> (i32, i32) {
    %c0_i32 = arith.constant 0 : i32
    %c0_i32_0 = arith.constant 0 : i32
    return %arg0, %c0_i32 : i32, i32
  }
  func.func @transform_2(%arg0: i32) -> (i32, i32) {
    %c0_i32 = arith.constant 0 : i32
    %c0_i32_0 = arith.constant 0 : i32
    %c0_i32_1 = arith.constant 0 : i32
    return %c0_i32, %c0_i32_0 : i32, i32
  }
  func.func @transform_3(%arg0: i32) -> (i32, i32) {
    %c0_i32 = arith.constant 0 : i32
    %c0_i32_0 = arith.constant 0 : i32
    %c0_i32_1 = arith.constant 0 : i32
    return %c0_i32, %c0_i32_0 : i32, i32
  }
  func.func @transform_4(%arg0: i32) -> (i32, i32) {
    %c0_i32 = arith.constant 0 : i32
    %c0_i32_0 = arith.constant 0 : i32
    %c0_i32_1 = arith.constant 0 : i32
    return %c0_i32, %c0_i32_0 : i32, i32
  }
  func.func @transform_5(%arg0: i32) -> (i32, i32) {
    %c0_i32 = arith.constant 0 : i32
    %c0_i32_0 = arith.constant 0 : i32
    return %arg0, %c0_i32 : i32, i32
  }
}

</mosaic_0001>

<llo_original>
// kernel: resnet_block_forward.2
$region0: #{resnet_block_forward.2}
  #allocation0 [shape = 'u32[]', space=smem, size = 0x4, offset = 0x4, fixed_abs, tag = 'smem constant byte address 0x4 - core index']
  #allocation1 [shape = 'u32[144,128]{1,0:T(1,128)}', space=vmem, size = 0x12000, scoped, tag = 'internal scratch']
  %s0 = inlined_call_operand.vmem [shape: bf16[2,256,36], index: 0, kind: input, shape index: {}]
  %s1 = inlined_call_operand.vmem [shape: bf16[36,8], index: 1, kind: input, shape index: {}]
  %s2 = inlined_call_operand.vmem [shape: f32[1,8], index: 2, kind: input, shape index: {}]
  %s3 = inlined_call_operand.vmem [shape: bf16[2,256,8], index: 3, kind: output, shape index: {0}]
  %s4 = inlined_call_operand.vmem [shape: f32[2,8,8], index: 4, kind: output, shape index: {1}]
  %s5 = inlined_call_operand.vmem [shape: f32[2,8,8], index: 5, kind: output, shape index: {2}]
  %6 = xla_tuple %s3, %s4, %s5
  %s7 = sld [smem:[#allocation0]]
  $region65: #{resnet_block_forward.2} parent=0
    _
  %s9 = ssub.s32 1, %s7
  %s10 = scalar_select 0, %s9, %s7
  loop: start=0, step=1, limit=4
  $region2: #{resnet_block_forward.2} parent=0 // loop_pre_header
    _
  $region3: #{resnet_block_forward.2} parent=0 // loop_header
    %s12 = sphi 0, %s16
    %p13 = scmp.ge.s32.totalorder %s12, 4
    %s19 = sphi 0, %s31
    %s20 = sphi 0, %s27
    %s21 = sphi 0, %s19
    %s22 = sphi 0, %s20
    %s23 = sphi 0, %s21
    %s24 = sphi 0, %s22
    %s36 = sphi 0, %s38
    %s39 = sphi 0, %s36
    %s40 = sphi 0, %s39
    %s56 = sphi 0, %s40
    %s60 = sphi 0, %s60
    %s62 = sphi 0, %s60
    %s63 = sphi 0, %s62
    %s77 = sphi 0, %s63
    %s81 = sphi 0, %s81
    %s83 = sphi 0, %s81
    %s84 = sphi 0, %s83
    %s98 = sphi 0, %s84
    %s106 = sphi 0, %s108
    %s109 = sphi 0, %s106
    %s110 = sphi 0, %s109
    %s126 = sphi 0, %s110
    %s132 = sphi 0, %s134
    %s135 = sphi 0, %s132
    %s136 = sphi 0, %s135
    %s152 = sphi 0, %s136
    %s158 = sphi 0, %s160
    %s161 = sphi 0, %s158
    %s162 = sphi 0, %s161
    %s178 = sphi 0, %s162
  $region4: #{resnet_block_forward.2} parent=0 // loop_header_branch
    %15 = sbr.rel (%p13) target = $region8
  $region5: #{resnet_block_forward.2} parent=0 // loop_body
    %s17 = ssub.s32 %s12, 1
    %s18 = ssub.s32 %s12, 2
    %s25 = sadd.s32 1, %s20
    %p26 = scmp.ge.s32.totalorder %s25, 1
    %s27 = scalar_select %p26, 0, %s25
    %s28 = sadd.s32 1, %s19
    %s29 = scalar_select %p26, %s28, %s19
    %p30 = scmp.ge.s32.totalorder %s29, 2
    %s31 = scalar_select %p30, 0, %s29
    %s32 = ssub.s32 %s19, %s31
    %s33 = ssub.s32 %s20, %s27
    %s34 = sor.u32 %s32, %s33
    %p35 = scmp.eq.s32.totalorder %s34, 0
    %s37 = sadd.s32 %s36, 1
    %s38 = scalar_select %p35, %s36, %s37
    %p41 = pneg %p35
    %p42 = scmp.eq.s32.totalorder %s12, 1
    %p43 = por %p41, %p42
    %p44 = scmp.ne.s32.totalorder %s36, %s39
    %p45 = scmp.eq.s32.totalorder %s12, 0
    %p46 = por %p44, %p45
    %p47 = scmp.ne.s32.totalorder %s36, %s39
    %p48 = scmp.eq.s32.totalorder %s17, 1
    %p49 = por %p47, %p48
    %p50 = scmp.ne.s32.totalorder %s39, %s40
    %p51 = scmp.eq.s32.totalorder %s17, 0
    %p52 = por %p50, %p51
    %p53 = scmp.ne.s32.totalorder %s39, %s40
    %p54 = scmp.eq.s32.totalorder %s18, 1
    %p55 = por %p53, %p54
    %p57 = scmp.ne.s32.totalorder %s40, %s56
    %p58 = scmp.eq.s32.totalorder %s18, 0
    %p59 = por %p57, %p58
    %s61 = sadd.s32 %s60, 1
    %p64 = scmp.eq.s32.totalorder %s12, 1
    %p65 = scmp.ne.s32.totalorder %s60, %s62
    %p66 = scmp.eq.s32.totalorder %s12, 0
    %p67 = por %p65, %p66
    %p68 = scmp.ne.s32.totalorder %s60, %s62
    %p69 = scmp.eq.s32.totalorder %s17, 1
    %p70 = por %p68, %p69
    %p71 = scmp.ne.s32.totalorder %s62, %s63
    %p72 = scmp.eq.s32.totalorder %s17, 0
    %p73 = por %p71, %p72
    %p74 = scmp.ne.s32.totalorder %s62, %s63
    %p75 = scmp.eq.s32.totalorder %s18, 1
    %p76 = por %p74, %p75
    %p78 = scmp.ne.s32.totalorder %s63, %s77
    %p79 = scmp.eq.s32.totalorder %s18, 0
    %p80 = por %p78, %p79
    %s82 = sadd.s32 %s81, 1
    %p85 = scmp.eq.s32.totalorder %s12, 1
    %p86 = scmp.ne.s32.totalorder %s81, %s83
    %p87 = scmp.eq.s32.totalorder %s12, 0
    %p88 = por %p86, %p87
    %p89 = scmp.ne.s32.totalorder %s81, %s83
    %p90 = scmp.eq.s32.totalorder %s17, 1
    %p91 = por %p89, %p90
    %p92 = scmp.ne.s32.totalorder %s83, %s84
    %p93 = scmp.eq.s32.totalorder %s17, 0
    %p94 = por %p92, %p93
    %p95 = scmp.ne.s32.totalorder %s83, %s84
    %p96 = scmp.eq.s32.totalorder %s18, 1
    %p97 = por %p95, %p96
    %p99 = scmp.ne.s32.totalorder %s84, %s98
    %p100 = scmp.eq.s32.totalorder %s18, 0
    %p101 = por %p99, %p100
    %s102 = ssub.s32 %s19, %s31
    %s103 = ssub.s32 %s20, %s27
    %s104 = sor.u32 %s102, %s103
    %p105 = scmp.eq.s32.totalorder %s104, 0
    %s107 = sadd.s32 %s106, 1
    %s108 = scalar_select %p105, %s106, %s107
    %p111 = pneg %p105
    %p112 = scmp.eq.s32.totalorder %s12, 1
    %p113 = por %p111, %p112
    %p114 = scmp.ne.s32.totalorder %s106, %s109
    %p115 = scmp.eq.s32.totalorder %s12, 0
    %p116 = por %p114, %p115
    %p117 = scmp.ne.s32.totalorder %s106, %s109
    %p118 = scmp.eq.s32.totalorder %s17, 1
    %p119 = por %p117, %p118
    %p120 = scmp.ne.s32.totalorder %s109, %s110
    %p121 = scmp.eq.s32.totalorder %s17, 0
    %p122 = por %p120, %p121
    %p123 = scmp.ne.s32.totalorder %s109, %s110
    %p124 = scmp.eq.s32.totalorder %s18, 1
    %p125 = por %p123, %p124
    %p127 = scmp.ne.s32.totalorder %s110, %s126
    %p128 = scmp.eq.s32.totalorder %s18, 0
    %p129 = por %p127, %p128
    %s130 = ssub.s32 %s19, %s31
    %p131 = scmp.eq.s32.totalorder %s130, 0
    %s133 = sadd.s32 %s132, 1
    %s134 = scalar_select %p131, %s132, %s133
    %p137 = pneg %p131
    %p138 = scmp.eq.s32.totalorder %s12, 1
    %p139 = por %p137, %p138
    %p140 = scmp.ne.s32.totalorder %s132, %s135
    %p141 = scmp.eq.s32.totalorder %s12, 0
    %p142 = por %p140, %p141
    %p143 = scmp.ne.s32.totalorder %s132, %s135
    %p144 = scmp.eq.s32.totalorder %s17, 1
    %p145 = por %p143, %p144
    %p146 = scmp.ne.s32.totalorder %s135, %s136
    %p147 = scmp.eq.s32.totalorder %s17, 0
    %p148 = por %p146, %p147
    %p149 = scmp.ne.s32.totalorder %s135, %s136
    %p150 = scmp.eq.s32.totalorder %s18, 1
    %p151 = por %p149, %p150
    %p153 = scmp.ne.s32.totalorder %s136, %s152
    %p154 = scmp.eq.s32.totalorder %s18, 0
    %p155 = por %p153, %p154
    %s156 = ssub.s32 %s19, %s31
    %p157 = scmp.eq.s32.totalorder %s156, 0
    %s159 = sadd.s32 %s158, 1
    %s160 = scalar_select %p157, %s158, %s159
    %p163 = pneg %p157
    %p164 = scmp.eq.s32.totalorder %s12, 1
    %p165 = por %p163, %p164
    %p166 = scmp.ne.s32.totalorder %s158, %s161
    %p167 = scmp.eq.s32.totalorder %s12, 0
    %p168 = por %p166, %p167
    %p169 = scmp.ne.s32.totalorder %s158, %s161
    %p170 = scmp.eq.s32.totalorder %s17, 1
    %p171 = por %p169, %p170
    %p172 = scmp.ne.s32.totalorder %s161, %s162
    %p173 = scmp.eq.s32.totalorder %s17, 0
    %p174 = por %p172, %p173
    %p175 = scmp.ne.s32.totalorder %s161, %s162
    %p176 = scmp.eq.s32.totalorder %s18, 1
    %p177 = por %p175, %p176
    %p179 = scmp.ne.s32.totalorder %s162, %s178
    %p180 = scmp.eq.s32.totalorder %s18, 0
    %p181 = por %p179, %p180
    %p182 = scmp.le.s32.totalorder 1, %s12
    %p183 = scmp.lt.s32.totalorder %s12, 3
    %p184 = pnand %p182, %p183
    %p185 = pneg %p184
    // Predicated region
    $region9: #{resnet_block_forward.2} parent=5 // pred_check
      _
    $region10: #{resnet_block_forward.2} parent=5 // pred_check_branch
      %187 = sbr.rel (%p184) target = $region12
    $region11: #{resnet_block_forward.2} parent=5 // pred_region
      %s188 = ssub.s32 %s12, 1
      // Predicated region
      $region13: #{resnet_block_forward.2} parent=11 // pred_check
        %p189 = pneg %p73
      $region14: #{resnet_block_forward.2} parent=11 // pred_check_branch
        %191 = sbr.rel (%p189) target = $region16
      $region15: #{resnet_block_forward.2} parent=11 // pred_region
        _
      $region16: #{resnet_block_forward.2} parent=11 // pred_fallthru
        _
      // Predicated region
      $region17: #{resnet_block_forward.2} parent=11 // pred_check
        %p192 = pneg %p94
      $region18: #{resnet_block_forward.2} parent=11 // pred_check_branch
        %194 = sbr.rel (%p192) target = $region20
      $region19: #{resnet_block_forward.2} parent=11 // pred_region
        _
      $region20: #{resnet_block_forward.2} parent=11 // pred_fallthru
        _
    $region12: #{resnet_block_forward.2} parent=5 // pred_fallthru
      _
    %p195 = scmp.lt.s32.totalorder %s12, 2
    // Predicated region
    $region21: #{resnet_block_forward.2} parent=5 // pred_check
      %p196 = pneg %p195
    $region22: #{resnet_block_forward.2} parent=5 // pred_check_branch
      %198 = sbr.rel (%p196) target = $region24
    $region23: #{resnet_block_forward.2} parent=5 // pred_region
      // Predicated region
      $region25: #{resnet_block_forward.2} parent=23 // pred_check
        %p199 = pneg %p46
      $region26: #{resnet_block_forward.2} parent=23 // pred_check_branch
        %201 = sbr.rel (%p199) target = $region28
      $region27: #{resnet_block_forward.2} parent=23 // pred_region
        %s202 = smul.u32 32, %s20
        %p203 = scmp.lt.s32.totalorder %s19, 1
        %s204 = scalar_select %p203, %s19, 1
        %p205 = scmp.lt.s32.totalorder %s202, 31
        %s206 = scalar_select %p205, %s202, 31
        %s207 = smul.addr %s204, 32
        %s208 = sadd.s32 %s206, %s207
        %s209 = smul.addr %s208, 4
        %s210 = scalar_lea.vmem %s0, %s209
        %s211 = smul.u32 32, %s20
      $region28: #{resnet_block_forward.2} parent=23 // pred_fallthru
        _
    $region24: #{resnet_block_forward.2} parent=5 // pred_fallthru
      _
    %p212 = scmp.le.s32.totalorder 1, %s12
    %p213 = scmp.lt.s32.totalorder %s12, 3
    %p214 = pnand %p212, %p213
    %p215 = pneg %p214
    // Predicated region
    $region29: #{resnet_block_forward.2} parent=5 // pred_check
      _
    $region30: #{resnet_block_forward.2} parent=5 // pred_check_branch
      %217 = sbr.rel (%p214) target = $region32
    $region31: #{resnet_block_forward.2} parent=5 // pred_region
      %s218 = ssub.s32 %s12, 1
      %s219 = smul.u32 32, %s22
      %p220 = scmp.lt.s32.totalorder %s21, 1
      %s221 = scalar_select %p220, %s21, 1
      %p222 = scmp.lt.s32.totalorder %s219, 31
      %s223 = scalar_select %p222, %s219, 31
      %s224 = smul.addr %s221, 32
      %s225 = sadd.s32 %s223, %s224
      %s226 = smul.addr %s225, 4
      %s227 = scalar_lea.vmem %s0, %s226
      %p228 = pneg %p52
      %p229 = pneg %p49
      %p230 = pneg %p73
      %p231 = pneg %p70
      %p232 = pneg %p94
      %p233 = pneg %p91
      %p234 = pneg %p122
      %p235 = pneg %p119
      %s236 = smul.u32 32, %s22
      %p237 = scmp.lt.s32.totalorder %s21, 1
      %s238 = scalar_select %p237, %s21, 1
      %p239 = scmp.lt.s32.totalorder %s236, 31
      %s240 = scalar_select %p239, %s236, 31
      %s241 = smul.addr %s238, 32
      %s242 = sadd.s32 %s240, %s241
      %s243 = smul.addr %s242, 4
      %s244 = scalar_lea.vmem %s3, %s243
      %p245 = pneg %p148
      %p246 = pneg %p145
      %p247 = scmp.lt.s32.totalorder %s21, 1
      %s248 = scalar_select %p247, %s21, 1
      %s249 = smul.addr %s248, 8
      %s250 = scalar_lea.vmem %s4, %s249
      %p251 = pneg %p174
      %p252 = pneg %p171
      %p253 = scmp.lt.s32.totalorder %s21, 1
      %s254 = scalar_select %p253, %s21, 1
      %s255 = smul.addr %s254, 8
      %s256 = scalar_lea.vmem %s5, %s255
      %s257 = smul.u32 32, %s22
      %p258 = scmp.lt.s32.totalorder %s21, 1
      %s259 = scalar_select %p258, %s21, 1
      %p260 = scmp.lt.s32.totalorder %s257, 31
      %s261 = scalar_select %p260, %s257, 31
      %s262 = smul.addr %s259, 32
      %s263 = sadd.s32 %s261, %s262
      %s264 = smul.addr %s263, 4
      %s265 = scalar_lea.vmem %s0, %s264
      %s266 = smul.u32 32, %s22
      %s267 = smul.u32 32, %s22
      %p268 = scmp.lt.s32.totalorder %s21, 1
      %s269 = scalar_select %p268, %s21, 1
      %p270 = scmp.lt.s32.totalorder %s267, 31
      %s271 = scalar_select %p270, %s267, 31
      %s272 = smul.addr %s269, 32
      %s273 = sadd.s32 %s271, %s272
      %s274 = smul.addr %s273, 4
      %s275 = scalar_lea.vmem %s3, %s274
      %s276 = smul.u32 32, %s22
      %p277 = scmp.lt.s32.totalorder %s21, 1
      %s278 = scalar_select %p277, %s21, 1
      %s279 = smul.addr %s278, 8
      %s280 = scalar_lea.vmem %s4, %s279
      %p281 = scmp.lt.s32.totalorder %s21, 1
      %s282 = scalar_select %p281, %s21, 1
      %s283 = smul.addr %s282, 8
      %s284 = scalar_lea.vmem %s5, %s283
      %v286 = vld [vmem:[%s265] sm:$0xf]
      %v287 = vld [vmem:[%s265 + $0x4] sm:$0xf]
      %v288 = vld [vmem:[%s265 + $0x8] sm:$0xf]
      %v289 = vld [vmem:[%s265 + $0xc] sm:$0xf]
      %v290 = vld [vmem:[%s265 + $0x10] sm:$0xf]
      %v291 = vld [vmem:[%s265 + $0x14] sm:$0xf]
      %v292 = vld [vmem:[%s265 + $0x18] sm:$0xf]
      %v293 = vld [vmem:[%s265 + $0x1c] sm:$0xf]
      %v294 = vld [vmem:[%s265 + $0x20] sm:$0xf]
      %v295 = vld [vmem:[%s265 + $0x24] sm:$0xf]
      %v296 = vld [vmem:[%s265 + $0x28] sm:$0xf]
      %v297 = vld [vmem:[%s265 + $0x2c] sm:$0xf]
      %v298 = vld [vmem:[%s265 + $0x30] sm:$0xf]
      %v299 = vld [vmem:[%s265 + $0x34] sm:$0xf]
      %v300 = vld [vmem:[%s265 + $0x38] sm:$0xf]
      %v301 = vld [vmem:[%s265 + $0x3c] sm:$0xf]
      %v302 = vld [vmem:[%s265 + $0x40] sm:$0xf]
      %v303 = vld [vmem:[%s265 + $0x44] sm:$0xf]
      %v304 = vld [vmem:[%s265 + $0x48] sm:$0xf]
      %v305 = vld [vmem:[%s265 + $0x4c] sm:$0xf]
      %v306 = vld [vmem:[%s265 + $0x50] sm:$0xf]
      %v307 = vld [vmem:[%s265 + $0x54] sm:$0xf]
      %v308 = vld [vmem:[%s265 + $0x58] sm:$0xf]
      %v309 = vld [vmem:[%s265 + $0x5c] sm:$0xf]
      %v310 = vld [vmem:[%s265 + $0x60] sm:$0xf]
      %v311 = vld [vmem:[%s265 + $0x64] sm:$0xf]
      %v312 = vld [vmem:[%s265 + $0x68] sm:$0xf]
      %v313 = vld [vmem:[%s265 + $0x6c] sm:$0xf]
      %v314 = vld [vmem:[%s265 + $0x70] sm:$0xf]
      %v315 = vld [vmem:[%s265 + $0x74] sm:$0xf]
      %v316 = vld [vmem:[%s265 + $0x78] sm:$0xf]
      %v317 = vld [vmem:[%s265 + $0x7c] sm:$0xf]
      %v318 = vld [vmem:[%s1] sm:$0xf]
      %v319 = vld [vmem:[%s1 + $0x4] sm:$0xf]
      %v320 = vld [vmem:[%s1 + $0x8] sm:$0xf]
      %v321 = vld [vmem:[%s1 + $0xc] sm:$0xf]
      %v322 = vld [vmem:[%s1 + $0x10] sm:$0x3]
      %v323 = vld [vmem:[%s2] sm:$0x1]
      %v325 = vlaneseq
      %v326 = vshrl.u32 %v325, 7
      %v327 = vsub.s32 0, %v326
      %v328 = vrot.slane %v323, %v327
      %v362 = vunpack.c.l.b16 %v286
      %v363 = vunpack.c.l.b16 %v287
      %v364 = vunpack.c.l.b16 %v288
      %v365 = vunpack.c.l.b16 %v289
      %v366 = vunpack.c.l.b16 %v290
      %v367 = vunpack.c.l.b16 %v291
      %v368 = vunpack.c.l.b16 %v292
      %v369 = vunpack.c.l.b16 %v293
      %v370 = vunpack.c.l.b16 %v294
      %v371 = vunpack.c.l.b16 %v295
      %v372 = vunpack.c.l.b16 %v296
      %v373 = vunpack.c.l.b16 %v297
      %v374 = vunpack.c.l.b16 %v298
      %v375 = vunpack.c.l.b16 %v299
      %v376 = vunpack.c.l.b16 %v300
      %v377 = vunpack.c.l.b16 %v301
      %v378 = vunpack.c.l.b16 %v302
      %v379 = vunpack.c.l.b16 %v303
      %v380 = vunpack.c.l.b16 %v304
      %v381 = vunpack.c.l.b16 %v305
      %v382 = vunpack.c.l.b16 %v306
      %v383 = vunpack.c.l.b16 %v307
      %v384 = vunpack.c.l.b16 %v308
      %v385 = vunpack.c.l.b16 %v309
      %v386 = vunpack.c.l.b16 %v310
      %v387 = vunpack.c.l.b16 %v311
      %v388 = vunpack.c.l.b16 %v312
      %v389 = vunpack.c.l.b16 %v313
      %v390 = vunpack.c.l.b16 %v314
      %v391 = vunpack.c.l.b16 %v315
      %v392 = vunpack.c.l.b16 %v316
      %v393 = vunpack.c.l.b16 %v317
      %v394 = vpack.c.b16 %v363, %v362
      %v395 = vpack.c.b16 %v365, %v364
      %v396 = vpack.c.b16 %v367, %v366
      %v397 = vpack.c.b16 %v369, %v368
      %v398 = vpack.c.b16 %v371, %v370
      %v399 = vpack.c.b16 %v373, %v372
      %v400 = vpack.c.b16 %v375, %v374
      %v401 = vpack.c.b16 %v377, %v376
      %v402 = vpack.c.b16 %v379, %v378
      %v403 = vpack.c.b16 %v381, %v380
      %v404 = vpack.c.b16 %v383, %v382
      %v405 = vpack.c.b16 %v385, %v384
      %v406 = vpack.c.b16 %v387, %v386
      %v407 = vpack.c.b16 %v389, %v388
      %v408 = vpack.c.b16 %v391, %v390
      %v409 = vpack.c.b16 %v393, %v392
      %v415 = vunpack.c.l.b16 %v318
      %v416 = vunpack.c.l.b16 %v319
      %v417 = vunpack.c.l.b16 %v320
      %v418 = vunpack.c.l.b16 %v321
      %v419 = vunpack.c.l.b16 %v322
      %v420 = vpack.c.b16 %v416, %v415
      %v421 = vpack.c.b16 %v418, %v417
      %v422 = vpack.c.b16 %v419, %v419
      %vm425 = vcmask 293888
      %v427 = vsel %vm425, %v394, 0
      %v430 = vsel %vm425, %v395, 0
      %v433 = vsel %vm425, %v396, 0
      %v436 = vsel %vm425, %v397, 0
      %v439 = vsel %vm425, %v398, 0
      %v442 = vsel %vm425, %v399, 0
      %v445 = vsel %vm425, %v400, 0
      %v448 = vsel %vm425, %v401, 0
      %v451 = vsel %vm425, %v402, 0
      %v454 = vsel %vm425, %v403, 0
      %v457 = vsel %vm425, %v404, 0
      %v460 = vsel %vm425, %v405, 0
      %v463 = vsel %vm425, %v406, 0
      %v466 = vsel %vm425, %v407, 0
      %v469 = vsel %vm425, %v408, 0
      %v472 = vsel %vm425, %v409, 0
      %vm474 = vcmask 1041408
      %v476 = vsel %vm474, %v422, 0
      %478 = vmatprep.subr.bf16.mxu0 0
      %479 = vmatpush1.bf16.msra.mxu0 0
      %480 = vmatprep.subr.bf16.mxu0 0
      %481 = vmatpush1.bf16.msra.mxu0 0
      %482 = vmatprep.subr.bf16.mxu0 0
      %483 = vmatpush1.bf16.msra.mxu0 0
      %484 = vmatprep.subr.bf16.mxu0 0
      %485 = vmatpush1.bf16.msra.mxu0 0
      %486 = vmatprep.subr.bf16.mxu0 0
      %487 = vmatpush1.bf16.msra.mxu0 0
      %488 = vmatprep.subr.bf16.mxu0 0
      %489 = vmatpush1.bf16.msra.mxu0 %v476
      %490 = vmatprep.subr.bf16.mxu0 0
      %491 = vmatpush1.bf16.msra.mxu0 %v421
      %492 = vmatprep.subr.bf16.mxu0 0
      %493 = vmatpush1.bf16.msra.mxu0 %v420
      %494 = vmatprep.subr.bf16.mxu0 0
      %495 = vmatpush2.bf16.msra.mxu0 0
      %496 = vmatprep.subr.bf16.mxu0 0
      %497 = vmatpush2.bf16.msra.mxu0 0
      %498 = vmatprep.subr.bf16.mxu0 0
      %499 = vmatpush2.bf16.msra.mxu0 0
      %500 = vmatprep.subr.bf16.mxu0 0
      %501 = vmatpush2.bf16.msra.mxu0 0
      %502 = vmatprep.subr.bf16.mxu0 0
      %503 = vmatpush2.bf16.msra.mxu0 0
      %504 = vmatprep.subr.bf16.mxu0 0
      %505 = vmatpush2.bf16.msra.mxu0 0
      %506 = vmatprep.subr.bf16.mxu0 0
      %507 = vmatpush2.bf16.msra.mxu0 0
      %508 = vmatprep.subr.bf16.mxu0 0
      %509 = vmatpush2.bf16.msra.mxu0 0
      %510 = vmatprep.mubr.bf16.mxu0 0
      %511 = vmatmul.mubr.bf16.gmra.mxu0 %v427
      %v512 = vpop.f32.mrf.mxu0
      %v513 = vadd.f32 %v328, %v512
      %v514 = vpop.f32.mrf.mxu0
      %v515 = vpop.f32.mrf.mxu0
      %v516 = vadd.f32 %v328, %v515
      %v517 = vpop.f32.mrf.mxu0
      %518 = vmatprep.mubr.bf16.mxu0 0
      %519 = vmatmul.mubr.bf16.gmra.mxu0 %v430
      %v520 = vpop.f32.mrf.mxu0
      %v521 = vadd.f32 %v328, %v520
      %v522 = vpop.f32.mrf.mxu0
      %v523 = vpop.f32.mrf.mxu0
      %v524 = vadd.f32 %v328, %v523
      %v525 = vpop.f32.mrf.mxu0
      %526 = vmatprep.mubr.bf16.mxu0 0
      %527 = vmatmul.mubr.bf16.gmra.mxu0 %v433
      %v528 = vpop.f32.mrf.mxu0
      %v529 = vadd.f32 %v328, %v528
      %v530 = vpop.f32.mrf.mxu0
      %v531 = vpop.f32.mrf.mxu0
      %v532 = vadd.f32 %v328, %v531
      %v533 = vpop.f32.mrf.mxu0
      %534 = vmatprep.mubr.bf16.mxu0 0
      %535 = vmatmul.mubr.bf16.gmra.mxu0 %v436
      %v536 = vpop.f32.mrf.mxu0
      %v537 = vadd.f32 %v328, %v536
      %v538 = vpop.f32.mrf.mxu0
      %v539 = vpop.f32.mrf.mxu0
      %v540 = vadd.f32 %v328, %v539
      %v541 = vpop.f32.mrf.mxu0
      %542 = vmatprep.mubr.bf16.mxu0 0
      %543 = vmatmul.mubr.bf16.gmra.mxu0 %v439
      %v544 = vpop.f32.mrf.mxu0
      %v545 = vadd.f32 %v328, %v544
      %v546 = vpop.f32.mrf.mxu0
      %v547 = vpop.f32.mrf.mxu0
      %v548 = vadd.f32 %v328, %v547
      %v549 = vpop.f32.mrf.mxu0
      %550 = vmatprep.mubr.bf16.mxu0 0
      %551 = vmatmul.mubr.bf16.gmra.mxu0 %v442
      %v552 = vpop.f32.mrf.mxu0
      %v553 = vadd.f32 %v328, %v552
      %v554 = vpop.f32.mrf.mxu0
      %v555 = vpop.f32.mrf.mxu0
      %v556 = vadd.f32 %v328, %v555
      %v557 = vpop.f32.mrf.mxu0
      %558 = vmatprep.mubr.bf16.mxu0 0
      %559 = vmatmul.mubr.bf16.gmra.mxu0 %v445
      %v560 = vpop.f32.mrf.mxu0
      %v561 = vadd.f32 %v328, %v560
      %v562 = vpop.f32.mrf.mxu0
      %v563 = vpop.f32.mrf.mxu0
      %v564 = vadd.f32 %v328, %v563
      %v565 = vpop.f32.mrf.mxu0
      %566 = vmatprep.mubr.bf16.mxu0 0
      %567 = vmatmul.mubr.bf16.gmra.mxu0 %v448
      %v568 = vpop.f32.mrf.mxu0
      %v569 = vadd.f32 %v328, %v568
      %v570 = vpop.f32.mrf.mxu0
      %v571 = vpop.f32.mrf.mxu0
      %v572 = vadd.f32 %v328, %v571
      %v573 = vpop.f32.mrf.mxu0
      %574 = vmatprep.mubr.bf16.mxu0 0
      %575 = vmatmul.mubr.bf16.gmra.mxu0 %v451
      %v576 = vpop.f32.mrf.mxu0
      %v577 = vadd.f32 %v328, %v576
      %v578 = vpop.f32.mrf.mxu0
      %v579 = vpop.f32.mrf.mxu0
      %v580 = vadd.f32 %v328, %v579
      %v581 = vpop.f32.mrf.mxu0
      %582 = vmatprep.mubr.bf16.mxu0 0
      %583 = vmatmul.mubr.bf16.gmra.mxu0 %v454
      %v584 = vpop.f32.mrf.mxu0
      %v585 = vadd.f32 %v328, %v584
      %v586 = vpop.f32.mrf.mxu0
      %v587 = vpop.f32.mrf.mxu0
      %v588 = vadd.f32 %v328, %v587
      %v589 = vpop.f32.mrf.mxu0
      %590 = vmatprep.mubr.bf16.mxu0 0
      %591 = vmatmul.mubr.bf16.gmra.mxu0 %v457
      %v592 = vpop.f32.mrf.mxu0
      %v593 = vadd.f32 %v328, %v592
      %v594 = vpop.f32.mrf.mxu0
      %v595 = vpop.f32.mrf.mxu0
      %v596 = vadd.f32 %v328, %v595
      %v597 = vpop.f32.mrf.mxu0
      %598 = vmatprep.mubr.bf16.mxu0 0
      %599 = vmatmul.mubr.bf16.gmra.mxu0 %v460
      %v600 = vpop.f32.mrf.mxu0
      %v601 = vadd.f32 %v328, %v600
      %v602 = vpop.f32.mrf.mxu0
      %v603 = vpop.f32.mrf.mxu0
      %v604 = vadd.f32 %v328, %v603
      %v605 = vpop.f32.mrf.mxu0
      %606 = vmatprep.mubr.bf16.mxu0 0
      %607 = vmatmul.mubr.bf16.gmra.mxu0 %v463
      %v608 = vpop.f32.mrf.mxu0
      %v609 = vadd.f32 %v328, %v608
      %v610 = vpop.f32.mrf.mxu0
      %v611 = vpop.f32.mrf.mxu0
      %v612 = vadd.f32 %v328, %v611
      %v613 = vpop.f32.mrf.mxu0
      %614 = vmatprep.mubr.bf16.mxu0 0
      %615 = vmatmul.mubr.bf16.gmra.mxu0 %v466
      %v616 = vpop.f32.mrf.mxu0
      %v617 = vadd.f32 %v328, %v616
      %v618 = vpop.f32.mrf.mxu0
      %v619 = vpop.f32.mrf.mxu0
      %v620 = vadd.f32 %v328, %v619
      %v621 = vpop.f32.mrf.mxu0
      %622 = vmatprep.mubr.bf16.mxu0 0
      %623 = vmatmul.mubr.bf16.gmra.mxu0 %v469
      %v624 = vpop.f32.mrf.mxu0
      %v625 = vadd.f32 %v328, %v624
      %v626 = vpop.f32.mrf.mxu0
      %v627 = vpop.f32.mrf.mxu0
      %v628 = vadd.f32 %v328, %v627
      %v629 = vpop.f32.mrf.mxu0
      %630 = vmatprep.mubr.bf16.mxu0 0
      %631 = vmatmul.mubr.bf16.gmra.mxu0 %v472
      %v632 = vpop.f32.mrf.mxu0
      %v633 = vadd.f32 %v328, %v632
      %v634 = vpop.f32.mrf.mxu0
      %v635 = vpop.f32.mrf.mxu0
      %v636 = vadd.f32 %v328, %v635
      %v637 = vpop.f32.mrf.mxu0
      %638 = vdwg.mxu0
      %v639 = vmul.f32 %v513, 0.5
      %v640 = vmul.f32 %v516, 0.5
      %v641 = vmul.f32 %v521, 0.5
      %v642 = vmul.f32 %v524, 0.5
      %v643 = vmul.f32 %v529, 0.5
      %v644 = vmul.f32 %v532, 0.5
      %v645 = vmul.f32 %v537, 0.5
      %v646 = vmul.f32 %v540, 0.5
      %v647 = vmul.f32 %v545, 0.5
      %v648 = vmul.f32 %v548, 0.5
      %v649 = vmul.f32 %v553, 0.5
      %v650 = vmul.f32 %v556, 0.5
      %v651 = vmul.f32 %v561, 0.5
      %v652 = vmul.f32 %v564, 0.5
      %v653 = vmul.f32 %v569, 0.5
      %v654 = vmul.f32 %v572, 0.5
      %v655 = vmul.f32 %v577, 0.5
      %v656 = vmul.f32 %v580, 0.5
      %v657 = vmul.f32 %v585, 0.5
      %v658 = vmul.f32 %v588, 0.5
      %v659 = vmul.f32 %v593, 0.5
      %v660 = vmul.f32 %v596, 0.5
      %v661 = vmul.f32 %v601, 0.5
      %v662 = vmul.f32 %v604, 0.5
      %v663 = vmul.f32 %v609, 0.5
      %v664 = vmul.f32 %v612, 0.5
      %v665 = vmul.f32 %v617, 0.5
      %v666 = vmul.f32 %v620, 0.5
      %v667 = vmul.f32 %v625, 0.5
      %v668 = vmul.f32 %v628, 0.5
      %v669 = vmul.f32 %v633, 0.5
      %v670 = vmul.f32 %v636, 0.5
      %v671 = vmul.f32 %v513, 0.70710677
      %v672 = vmul.f32 %v516, 0.70710677
      %v673 = vmul.f32 %v521, 0.70710677
      %v674 = vmul.f32 %v524, 0.70710677
      %v675 = vmul.f32 %v529, 0.70710677
      %v676 = vmul.f32 %v532, 0.70710677
      %v677 = vmul.f32 %v537, 0.70710677
      %v678 = vmul.f32 %v540, 0.70710677
      %v679 = vmul.f32 %v545, 0.70710677
      %v680 = vmul.f32 %v548, 0.70710677
      %v681 = vmul.f32 %v553, 0.70710677
      %v682 = vmul.f32 %v556, 0.70710677
      %v683 = vmul.f32 %v561, 0.70710677
      %v684 = vmul.f32 %v564, 0.70710677
      %v685 = vmul.f32 %v569, 0.70710677
      %v686 = vmul.f32 %v572, 0.70710677
      %v687 = vmul.f32 %v577, 0.70710677
      %v688 = vmul.f32 %v580, 0.70710677
      %v689 = vmul.f32 %v585, 0.70710677
      %v690 = vmul.f32 %v588, 0.70710677
      %v691 = vmul.f32 %v593, 0.70710677
      %v692 = vmul.f32 %v596, 0.70710677
      %v693 = vmul.f32 %v601, 0.70710677
      %v694 = vmul.f32 %v604, 0.70710677
      %v695 = vmul.f32 %v609, 0.70710677
      %v696 = vmul.f32 %v612, 0.70710677
      %v697 = vmul.f32 %v617, 0.70710677
      %v698 = vmul.f32 %v620, 0.70710677
      %v699 = vmul.f32 %v625, 0.70710677
      %v700 = vmul.f32 %v628, 0.70710677
      %v701 = vmul.f32 %v633, 0.70710677
      %v702 = vmul.f32 %v636, 0.70710677
      %v703 = vand.u32 2147483647, %v671
      %v704 = vand.u32 2147483647, %v672
      %v705 = vand.u32 2147483647, %v673
      %v706 = vand.u32 2147483647, %v674
      %v707 = vand.u32 2147483647, %v675
      %v708 = vand.u32 2147483647, %v676
      %v709 = vand.u32 2147483647, %v677
      %v710 = vand.u32 2147483647, %v678
      %v711 = vand.u32 2147483647, %v679
      %v712 = vand.u32 2147483647, %v680
      %v713 = vand.u32 2147483647, %v681
      %v714 = vand.u32 2147483647, %v682
      %v715 = vand.u32 2147483647, %v683
      %v716 = vand.u32 2147483647, %v684
      %v717 = vand.u32 2147483647, %v685
      %v718 = vand.u32 2147483647, %v686
      %v719 = vand.u32 2147483647, %v687
      %v720 = vand.u32 2147483647, %v688
      %v721 = vand.u32 2147483647, %v689
      %v722 = vand.u32 2147483647, %v690
      %v723 = vand.u32 2147483647, %v691
      %v724 = vand.u32 2147483647, %v692
      %v725 = vand.u32 2147483647, %v693
      %v726 = vand.u32 2147483647, %v694
      %v727 = vand.u32 2147483647, %v695
      %v728 = vand.u32 2147483647, %v696
      %v729 = vand.u32 2147483647, %v697
      %v730 = vand.u32 2147483647, %v698
      %v731 = vand.u32 2147483647, %v699
      %v732 = vand.u32 2147483647, %v700
      %v733 = vand.u32 2147483647, %v701
      %v734 = vand.u32 2147483647, %v702
      %v735 = vmul.f32 %v703, 0.3275911
      %v736 = vmul.f32 %v704, 0.3275911
      %v737 = vmul.f32 %v705, 0.3275911
      %v738 = vmul.f32 %v706, 0.3275911
      %v739 = vmul.f32 %v707, 0.3275911
      %v740 = vmul.f32 %v708, 0.3275911
      %v741 = vmul.f32 %v709, 0.3275911
      %v742 = vmul.f32 %v710, 0.3275911
      %v743 = vmul.f32 %v711, 0.3275911
      %v744 = vmul.f32 %v712, 0.3275911
      %v745 = vmul.f32 %v713, 0.3275911
      %v746 = vmul.f32 %v714, 0.3275911
      %v747 = vmul.f32 %v715, 0.3275911
      %v748 = vmul.f32 %v716, 0.3275911
      %v749 = vmul.f32 %v717, 0.3275911
      %v750 = vmul.f32 %v718, 0.3275911
      %v751 = vmul.f32 %v719, 0.3275911
      %v752 = vmul.f32 %v720, 0.3275911
      %v753 = vmul.f32 %v721, 0.3275911
      %v754 = vmul.f32 %v722, 0.3275911
      %v755 = vmul.f32 %v723, 0.3275911
      %v756 = vmul.f32 %v724, 0.3275911
      %v757 = vmul.f32 %v725, 0.3275911
      %v758 = vmul.f32 %v726, 0.3275911
      %v759 = vmul.f32 %v727, 0.3275911
      %v760 = vmul.f32 %v728, 0.3275911
      %v761 = vmul.f32 %v729, 0.3275911
      %v762 = vmul.f32 %v730, 0.3275911
      %v763 = vmul.f32 %v731, 0.3275911
      %v764 = vmul.f32 %v732, 0.3275911
      %v765 = vmul.f32 %v733, 0.3275911
      %v766 = vmul.f32 %v734, 0.3275911
      %v767 = vadd.f32 %v735, 1.0
      %v768 = vadd.f32 %v736, 1.0
      %v769 = vadd.f32 %v737, 1.0
      %v770 = vadd.f32 %v738, 1.0
      %v771 = vadd.f32 %v739, 1.0
      %v772 = vadd.f32 %v740, 1.0
      %v773 = vadd.f32 %v741, 1.0
      %v774 = vadd.f32 %v742, 1.0
      %v775 = vadd.f32 %v743, 1.0
      %v776 = vadd.f32 %v744, 1.0
      %v777 = vadd.f32 %v745, 1.0
      %v778 = vadd.f32 %v746, 1.0
      %v779 = vadd.f32 %v747, 1.0
      %v780 = vadd.f32 %v748, 1.0
      %v781 = vadd.f32 %v749, 1.0
      %v782 = vadd.f32 %v750, 1.0
      %v783 = vadd.f32 %v751, 1.0
      %v784 = vadd.f32 %v752, 1.0
      %v785 = vadd.f32 %v753, 1.0
      %v786 = vadd.f32 %v754, 1.0
      %v787 = vadd.f32 %v755, 1.0
      %v788 = vadd.f32 %v756, 1.0
      %v789 = vadd.f32 %v757, 1.0
      %v790 = vadd.f32 %v758, 1.0
      %v791 = vadd.f32 %v759, 1.0
      %v792 = vadd.f32 %v760, 1.0
      %v793 = vadd.f32 %v761, 1.0
      %v794 = vadd.f32 %v762, 1.0
      %v795 = vadd.f32 %v763, 1.0
      %v796 = vadd.f32 %v764, 1.0
      %v797 = vadd.f32 %v765, 1.0
      %v798 = vadd.f32 %v766, 1.0
      %v799 = vrcp.pop %v767
      %v800 = vmul.f32 1.0, %v799
      %v801 = vrcp.pop %v768
      %v802 = vmul.f32 1.0, %v801
      %v803 = vrcp.pop %v769
      %v804 = vmul.f32 1.0, %v803
      %v805 = vrcp.pop %v770
      %v806 = vmul.f32 1.0, %v805
      %v807 = vrcp.pop %v771
      %v808 = vmul.f32 1.0, %v807
      %v809 = vrcp.pop %v772
      %v810 = vmul.f32 1.0, %v809
      %v811 = vrcp.pop %v773
      %v812 = vmul.f32 1.0, %v811
      %v813 = vrcp.pop %v774
      %v814 = vmul.f32 1.0, %v813
      %v815 = vrcp.pop %v775
      %v816 = vmul.f32 1.0, %v815
      %v817 = vrcp.pop %v776
      %v818 = vmul.f32 1.0, %v817
      %v819 = vrcp.pop %v777
      %v820 = vmul.f32 1.0, %v819
      %v821 = vrcp.pop %v778
      %v822 = vmul.f32 1.0, %v821
      %v823 = vrcp.pop %v779
      %v824 = vmul.f32 1.0, %v823
      %v825 = vrcp.pop %v780
      %v826 = vmul.f32 1.0, %v825
      %v827 = vrcp.pop %v781
      %v828 = vmul.f32 1.0, %v827
      %v829 = vrcp.pop %v782
      %v830 = vmul.f32 1.0, %v829
      %v831 = vrcp.pop %v783
      %v832 = vmul.f32 1.0, %v831
      %v833 = vrcp.pop %v784
      %v834 = vmul.f32 1.0, %v833
      %v835 = vrcp.pop %v785
      %v836 = vmul.f32 1.0, %v835
      %v837 = vrcp.pop %v786
      %v838 = vmul.f32 1.0, %v837
      %v839 = vrcp.pop %v787
      %v840 = vmul.f32 1.0, %v839
      %v841 = vrcp.pop %v788
      %v842 = vmul.f32 1.0, %v841
      %v843 = vrcp.pop %v789
      %v844 = vmul.f32 1.0, %v843
      %v845 = vrcp.pop %v790
      %v846 = vmul.f32 1.0, %v845
      %v847 = vrcp.pop %v791
      %v848 = vmul.f32 1.0, %v847
      %v849 = vrcp.pop %v792
      %v850 = vmul.f32 1.0, %v849
      %v851 = vrcp.pop %v793
      %v852 = vmul.f32 1.0, %v851
      %v853 = vrcp.pop %v794
      %v854 = vmul.f32 1.0, %v853
      %v855 = vrcp.pop %v795
      %v856 = vmul.f32 1.0, %v855
      %v857 = vrcp.pop %v796
      %v858 = vmul.f32 1.0, %v857
      %v859 = vrcp.pop %v797
      %v860 = vmul.f32 1.0, %v859
      %v861 = vrcp.pop %v798
      %v862 = vmul.f32 1.0, %v861
      %v863 = vmul.f32 %v800, 1.0614054
      %v864 = vmul.f32 %v802, 1.0614054
      %v865 = vmul.f32 %v804, 1.0614054
      %v866 = vmul.f32 %v806, 1.0614054
      %v867 = vmul.f32 %v808, 1.0614054
      %v868 = vmul.f32 %v810, 1.0614054
      %v869 = vmul.f32 %v812, 1.0614054
      %v870 = vmul.f32 %v814, 1.0614054
      %v871 = vmul.f32 %v816, 1.0614054
      %v872 = vmul.f32 %v818, 1.0614054
      %v873 = vmul.f32 %v820, 1.0614054
      %v874 = vmul.f32 %v822, 1.0614054
      %v875 = vmul.f32 %v824, 1.0614054
      %v876 = vmul.f32 %v826, 1.0614054
      %v877 = vmul.f32 %v828, 1.0614054
      %v878 = vmul.f32 %v830, 1.0614054
      %v879 = vmul.f32 %v832, 1.0614054
      %v880 = vmul.f32 %v834, 1.0614054
      %v881 = vmul.f32 %v836, 1.0614054
      %v882 = vmul.f32 %v838, 1.0614054
      %v883 = vmul.f32 %v840, 1.0614054
      %v884 = vmul.f32 %v842, 1.0614054
      %v885 = vmul.f32 %v844, 1.0614054
      %v886 = vmul.f32 %v846, 1.0614054
      %v887 = vmul.f32 %v848, 1.0614054
      %v888 = vmul.f32 %v850, 1.0614054
      %v889 = vmul.f32 %v852, 1.0614054
      %v890 = vmul.f32 %v854, 1.0614054
      %v891 = vmul.f32 %v856, 1.0614054
      %v892 = vmul.f32 %v858, 1.0614054
      %v893 = vmul.f32 %v860, 1.0614054
      %v894 = vmul.f32 %v862, 1.0614054
      %v895 = vadd.f32 %v863, -1.4531521
      %v896 = vadd.f32 %v864, -1.4531521
      %v897 = vadd.f32 %v865, -1.4531521
      %v898 = vadd.f32 %v866, -1.4531521
      %v899 = vadd.f32 %v867, -1.4531521
      %v900 = vadd.f32 %v868, -1.4531521
      %v901 = vadd.f32 %v869, -1.4531521
      %v902 = vadd.f32 %v870, -1.4531521
      %v903 = vadd.f32 %v871, -1.4531521
      %v904 = vadd.f32 %v872, -1.4531521
      %v905 = vadd.f32 %v873, -1.4531521
      %v906 = vadd.f32 %v874, -1.4531521
      %v907 = vadd.f32 %v875, -1.4531521
      %v908 = vadd.f32 %v876, -1.4531521
      %v909 = vadd.f32 %v877, -1.4531521
      %v910 = vadd.f32 %v878, -1.4531521
      %v911 = vadd.f32 %v879, -1.4531521
      %v912 = vadd.f32 %v880, -1.4531521
      %v913 = vadd.f32 %v881, -1.4531521
      %v914 = vadd.f32 %v882, -1.4531521
      %v915 = vadd.f32 %v883, -1.4531521
      %v916 = vadd.f32 %v884, -1.4531521
      %v917 = vadd.f32 %v885, -1.4531521
      %v918 = vadd.f32 %v886, -1.4531521
      %v919 = vadd.f32 %v887, -1.4531521
      %v920 = vadd.f32 %v888, -1.4531521
      %v921 = vadd.f32 %v889, -1.4531521
      %v922 = vadd.f32 %v890, -1.4531521
      %v923 = vadd.f32 %v891, -1.4531521
      %v924 = vadd.f32 %v892, -1.4531521
      %v925 = vadd.f32 %v893, -1.4531521
      %v926 = vadd.f32 %v894, -1.4531521
      %v927 = vmul.f32 %v800, %v895
      %v928 = vmul.f32 %v802, %v896
      %v929 = vmul.f32 %v804, %v897
      %v930 = vmul.f32 %v806, %v898
      %v931 = vmul.f32 %v808, %v899
      %v932 = vmul.f32 %v810, %v900
      %v933 = vmul.f32 %v812, %v901
      %v934 = vmul.f32 %v814, %v902
      %v935 = vmul.f32 %v816, %v903
      %v936 = vmul.f32 %v818, %v904
      %v937 = vmul.f32 %v820, %v905
      %v938 = vmul.f32 %v822, %v906
      %v939 = vmul.f32 %v824, %v907
      %v940 = vmul.f32 %v826, %v908
      %v941 = vmul.f32 %v828, %v909
      %v942 = vmul.f32 %v830, %v910
      %v943 = vmul.f32 %v832, %v911
      %v944 = vmul.f32 %v834, %v912
      %v945 = vmul.f32 %v836, %v913
      %v946 = vmul.f32 %v838, %v914
      %v947 = vmul.f32 %v840, %v915
      %v948 = vmul.f32 %v842, %v916
      %v949 = vmul.f32 %v844, %v917
      %v950 = vmul.f32 %v846, %v918
      %v951 = vmul.f32 %v848, %v919
      %v952 = vmul.f32 %v850, %v920
      %v953 = vmul.f32 %v852, %v921
      %v954 = vmul.f32 %v854, %v922
      %v955 = vmul.f32 %v856, %v923
      %v956 = vmul.f32 %v858, %v924
      %v957 = vmul.f32 %v860, %v925
      %v958 = vmul.f32 %v862, %v926
      %v959 = vadd.f32 %v927, 1.4214138
      %v960 = vadd.f32 %v928, 1.4214138
      %v961 = vadd.f32 %v929, 1.4214138
      %v962 = vadd.f32 %v930, 1.4214138
      %v963 = vadd.f32 %v931, 1.4214138
      %v964 = vadd.f32 %v932, 1.4214138
      %v965 = vadd.f32 %v933, 1.4214138
      %v966 = vadd.f32 %v934, 1.4214138
      %v967 = vadd.f32 %v935, 1.4214138
      %v968 = vadd.f32 %v936, 1.4214138
      %v969 = vadd.f32 %v937, 1.4214138
      %v970 = vadd.f32 %v938, 1.4214138
      %v971 = vadd.f32 %v939, 1.4214138
      %v972 = vadd.f32 %v940, 1.4214138
      %v973 = vadd.f32 %v941, 1.4214138
      %v974 = vadd.f32 %v942, 1.4214138
      %v975 = vadd.f32 %v943, 1.4214138
      %v976 = vadd.f32 %v944, 1.4214138
      %v977 = vadd.f32 %v945, 1.4214138
      %v978 = vadd.f32 %v946, 1.4214138
      %v979 = vadd.f32 %v947, 1.4214138
      %v980 = vadd.f32 %v948, 1.4214138
      %v981 = vadd.f32 %v949, 1.4214138
      %v982 = vadd.f32 %v950, 1.4214138
      %v983 = vadd.f32 %v951, 1.4214138
      %v984 = vadd.f32 %v952, 1.4214138
      %v985 = vadd.f32 %v953, 1.4214138
      %v986 = vadd.f32 %v954, 1.4214138
      %v987 = vadd.f32 %v955, 1.4214138
      %v988 = vadd.f32 %v956, 1.4214138
      %v989 = vadd.f32 %v957, 1.4214138
      %v990 = vadd.f32 %v958, 1.4214138
      %v991 = vmul.f32 %v800, %v959
      %v992 = vmul.f32 %v802, %v960
      %v993 = vmul.f32 %v804, %v961
      %v994 = vmul.f32 %v806, %v962
      %v995 = vmul.f32 %v808, %v963
      %v996 = vmul.f32 %v810, %v964
      %v997 = vmul.f32 %v812, %v965
      %v998 = vmul.f32 %v814, %v966
      %v999 = vmul.f32 %v816, %v967
      %v1000 = vmul.f32 %v818, %v968
      %v1001 = vmul.f32 %v820, %v969
      %v1002 = vmul.f32 %v822, %v970
      %v1003 = vmul.f32 %v824, %v971
      %v1004 = vmul.f32 %v826, %v972
      %v1005 = vmul.f32 %v828, %v973
      %v1006 = vmul.f32 %v830, %v974
      %v1007 = vmul.f32 %v832, %v975
      %v1008 = vmul.f32 %v834, %v976
      %v1009 = vmul.f32 %v836, %v977
      %v1010 = vmul.f32 %v838, %v978
      %v1011 = vmul.f32 %v840, %v979
      %v1012 = vmul.f32 %v842, %v980
      %v1013 = vmul.f32 %v844, %v981
      %v1014 = vmul.f32 %v846, %v982
      %v1015 = vmul.f32 %v848, %v983
      %v1016 = vmul.f32 %v850, %v984
      %v1017 = vmul.f32 %v852, %v985
      %v1018 = vmul.f32 %v854, %v986
      %v1019 = vmul.f32 %v856, %v987
      %v1020 = vmul.f32 %v858, %v988
      %v1021 = vmul.f32 %v860, %v989
      %v1022 = vmul.f32 %v862, %v990
      %v1023 = vadd.f32 %v991, -0.28449672
      %v1024 = vadd.f32 %v992, -0.28449672
      %v1025 = vadd.f32 %v993, -0.28449672
      %v1026 = vadd.f32 %v994, -0.28449672
      %v1027 = vadd.f32 %v995, -0.28449672
      %v1028 = vadd.f32 %v996, -0.28449672
      %v1029 = vadd.f32 %v997, -0.28449672
      %v1030 = vadd.f32 %v998, -0.28449672
      %v1031 = vadd.f32 %v999, -0.28449672
      %v1032 = vadd.f32 %v1000, -0.28449672
      %v1033 = vadd.f32 %v1001, -0.28449672
      %v1034 = vadd.f32 %v1002, -0.28449672
      %v1035 = vadd.f32 %v1003, -0.28449672
      %v1036 = vadd.f32 %v1004, -0.28449672
      %v1037 = vadd.f32 %v1005, -0.28449672
      %v1038 = vadd.f32 %v1006, -0.28449672
      %v1039 = vadd.f32 %v1007, -0.28449672
      %v1040 = vadd.f32 %v1008, -0.28449672
      %v1041 = vadd.f32 %v1009, -0.28449672
      %v1042 = vadd.f32 %v1010, -0.28449672
      %v1043 = vadd.f32 %v1011, -0.28449672
      %v1044 = vadd.f32 %v1012, -0.28449672
      %v1045 = vadd.f32 %v1013, -0.28449672
      %v1046 = vadd.f32 %v1014, -0.28449672
      %v1047 = vadd.f32 %v1015, -0.28449672
      %v1048 = vadd.f32 %v1016, -0.28449672
      %v1049 = vadd.f32 %v1017, -0.28449672
      %v1050 = vadd.f32 %v1018, -0.28449672
      %v1051 = vadd.f32 %v1019, -0.28449672
      %v1052 = vadd.f32 %v1020, -0.28449672
      %v1053 = vadd.f32 %v1021, -0.28449672
      %v1054 = vadd.f32 %v1022, -0.28449672
      %v1055 = vmul.f32 %v800, %v1023
      %v1056 = vmul.f32 %v802, %v1024
      %v1057 = vmul.f32 %v804, %v1025
      %v1058 = vmul.f32 %v806, %v1026
      %v1059 = vmul.f32 %v808, %v1027
      %v1060 = vmul.f32 %v810, %v1028
      %v1061 = vmul.f32 %v812, %v1029
      %v1062 = vmul.f32 %v814, %v1030
      %v1063 = vmul.f32 %v816, %v1031
      %v1064 = vmul.f32 %v818, %v1032
      %v1065 = vmul.f32 %v820, %v1033
      %v1066 = vmul.f32 %v822, %v1034
      %v1067 = vmul.f32 %v824, %v1035
      %v1068 = vmul.f32 %v826, %v1036
      %v1069 = vmul.f32 %v828, %v1037
      %v1070 = vmul.f32 %v830, %v1038
      %v1071 = vmul.f32 %v832, %v1039
      %v1072 = vmul.f32 %v834, %v1040
      %v1073 = vmul.f32 %v836, %v1041
      %v1074 = vmul.f32 %v838, %v1042
      %v1075 = vmul.f32 %v840, %v1043
      %v1076 = vmul.f32 %v842, %v1044
      %v1077 = vmul.f32 %v844, %v1045
      %v1078 = vmul.f32 %v846, %v1046
      %v1079 = vmul.f32 %v848, %v1047
      %v1080 = vmul.f32 %v850, %v1048
      %v1081 = vmul.f32 %v852, %v1049
      %v1082 = vmul.f32 %v854, %v1050
      %v1083 = vmul.f32 %v856, %v1051
      %v1084 = vmul.f32 %v858, %v1052
      %v1085 = vmul.f32 %v860, %v1053
      %v1086 = vmul.f32 %v862, %v1054
      %v1087 = vadd.f32 %v1055, 0.2548296
      %v1088 = vadd.f32 %v1056, 0.2548296
      %v1089 = vadd.f32 %v1057, 0.2548296
      %v1090 = vadd.f32 %v1058, 0.2548296
      %v1091 = vadd.f32 %v1059, 0.2548296
      %v1092 = vadd.f32 %v1060, 0.2548296
      %v1093 = vadd.f32 %v1061, 0.2548296
      %v1094 = vadd.f32 %v1062, 0.2548296
      %v1095 = vadd.f32 %v1063, 0.2548296
      %v1096 = vadd.f32 %v1064, 0.2548296
      %v1097 = vadd.f32 %v1065, 0.2548296
      %v1098 = vadd.f32 %v1066, 0.2548296
      %v1099 = vadd.f32 %v1067, 0.2548296
      %v1100 = vadd.f32 %v1068, 0.2548296
      %v1101 = vadd.f32 %v1069, 0.2548296
      %v1102 = vadd.f32 %v1070, 0.2548296
      %v1103 = vadd.f32 %v1071, 0.2548296
      %v1104 = vadd.f32 %v1072, 0.2548296
      %v1105 = vadd.f32 %v1073, 0.2548296
      %v1106 = vadd.f32 %v1074, 0.2548296
      %v1107 = vadd.f32 %v1075, 0.2548296
      %v1108 = vadd.f32 %v1076, 0.2548296
      %v1109 = vadd.f32 %v1077, 0.2548296
      %v1110 = vadd.f32 %v1078, 0.2548296
      %v1111 = vadd.f32 %v1079, 0.2548296
      %v1112 = vadd.f32 %v1080, 0.2548296
      %v1113 = vadd.f32 %v1081, 0.2548296
      %v1114 = vadd.f32 %v1082, 0.2548296
      %v1115 = vadd.f32 %v1083, 0.2548296
      %v1116 = vadd.f32 %v1084, 0.2548296
      %v1117 = vadd.f32 %v1085, 0.2548296
      %v1118 = vadd.f32 %v1086, 0.2548296
      %v1119 = vmul.f32 %v800, %v1087
      %v1120 = vmul.f32 %v802, %v1088
      %v1121 = vmul.f32 %v804, %v1089
      %v1122 = vmul.f32 %v806, %v1090
      %v1123 = vmul.f32 %v808, %v1091
      %v1124 = vmul.f32 %v810, %v1092
      %v1125 = vmul.f32 %v812, %v1093
      %v1126 = vmul.f32 %v814, %v1094
      %v1127 = vmul.f32 %v816, %v1095
      %v1128 = vmul.f32 %v818, %v1096
      %v1129 = vmul.f32 %v820, %v1097
      %v1130 = vmul.f32 %v822, %v1098
      %v1131 = vmul.f32 %v824, %v1099
      %v1132 = vmul.f32 %v826, %v1100
      %v1133 = vmul.f32 %v828, %v1101
      %v1134 = vmul.f32 %v830, %v1102
      %v1135 = vmul.f32 %v832, %v1103
      %v1136 = vmul.f32 %v834, %v1104
      %v1137 = vmul.f32 %v836, %v1105
      %v1138 = vmul.f32 %v838, %v1106
      %v1139 = vmul.f32 %v840, %v1107
      %v1140 = vmul.f32 %v842, %v1108
      %v1141 = vmul.f32 %v844, %v1109
      %v1142 = vmul.f32 %v846, %v1110
      %v1143 = vmul.f32 %v848, %v1111
      %v1144 = vmul.f32 %v850, %v1112
      %v1145 = vmul.f32 %v852, %v1113
      %v1146 = vmul.f32 %v854, %v1114
      %v1147 = vmul.f32 %v856, %v1115
      %v1148 = vmul.f32 %v858, %v1116
      %v1149 = vmul.f32 %v860, %v1117
      %v1150 = vmul.f32 %v862, %v1118
      %v1151 = vsub.f32 0.0, %v703
      %v1152 = vsub.f32 0.0, %v704
      %v1153 = vsub.f32 0.0, %v705
      %v1154 = vsub.f32 0.0, %v706
      %v1155 = vsub.f32 0.0, %v707
      %v1156 = vsub.f32 0.0, %v708
      %v1157 = vsub.f32 0.0, %v709
      %v1158 = vsub.f32 0.0, %v710
      %v1159 = vsub.f32 0.0, %v711
      %v1160 = vsub.f32 0.0, %v712
      %v1161 = vsub.f32 0.0, %v713
      %v1162 = vsub.f32 0.0, %v714
      %v1163 = vsub.f32 0.0, %v715
      %v1164 = vsub.f32 0.0, %v716
      %v1165 = vsub.f32 0.0, %v717
      %v1166 = vsub.f32 0.0, %v718
      %v1167 = vsub.f32 0.0, %v719
      %v1168 = vsub.f32 0.0, %v720
      %v1169 = vsub.f32 0.0, %v721
      %v1170 = vsub.f32 0.0, %v722
      %v1171 = vsub.f32 0.0, %v723
      %v1172 = vsub.f32 0.0, %v724
      %v1173 = vsub.f32 0.0, %v725
      %v1174 = vsub.f32 0.0, %v726
      %v1175 = vsub.f32 0.0, %v727
      %v1176 = vsub.f32 0.0, %v728
      %v1177 = vsub.f32 0.0, %v729
      %v1178 = vsub.f32 0.0, %v730
      %v1179 = vsub.f32 0.0, %v731
      %v1180 = vsub.f32 0.0, %v732
      %v1181 = vsub.f32 0.0, %v733
      %v1182 = vsub.f32 0.0, %v734
      %v1183 = vmul.f32 %v1151, %v703
      %v1184 = vmul.f32 %v1152, %v704
      %v1185 = vmul.f32 %v1153, %v705
      %v1186 = vmul.f32 %v1154, %v706
      %v1187 = vmul.f32 %v1155, %v707
      %v1188 = vmul.f32 %v1156, %v708
      %v1189 = vmul.f32 %v1157, %v709
      %v1190 = vmul.f32 %v1158, %v710
      %v1191 = vmul.f32 %v1159, %v711
      %v1192 = vmul.f32 %v1160, %v712
      %v1193 = vmul.f32 %v1161, %v713
      %v1194 = vmul.f32 %v1162, %v714
      %v1195 = vmul.f32 %v1163, %v715
      %v1196 = vmul.f32 %v1164, %v716
      %v1197 = vmul.f32 %v1165, %v717
      %v1198 = vmul.f32 %v1166, %v718
      %v1199 = vmul.f32 %v1167, %v719
      %v1200 = vmul.f32 %v1168, %v720
      %v1201 = vmul.f32 %v1169, %v721
      %v1202 = vmul.f32 %v1170, %v722
      %v1203 = vmul.f32 %v1171, %v723
      %v1204 = vmul.f32 %v1172, %v724
      %v1205 = vmul.f32 %v1173, %v725
      %v1206 = vmul.f32 %v1174, %v726
      %v1207 = vmul.f32 %v1175, %v727
      %v1208 = vmul.f32 %v1176, %v728
      %v1209 = vmul.f32 %v1177, %v729
      %v1210 = vmul.f32 %v1178, %v730
      %v1211 = vmul.f32 %v1179, %v731
      %v1212 = vmul.f32 %v1180, %v732
      %v1213 = vmul.f32 %v1181, %v733
      %v1214 = vmul.f32 %v1182, %v734
      %v1215 = vmul.f32 %v1183, 1.442695
      %v1216 = vpow.pop %v1215
      %v1217 = vmul.f32 %v1184, 1.442695
      %v1218 = vpow.pop %v1217
      %v1219 = vmul.f32 %v1185, 1.442695
      %v1220 = vpow.pop %v1219
      %v1221 = vmul.f32 %v1186, 1.442695
      %v1222 = vpow.pop %v1221
      %v1223 = vmul.f32 %v1187, 1.442695
      %v1224 = vpow.pop %v1223
      %v1225 = vmul.f32 %v1188, 1.442695
      %v1226 = vpow.pop %v1225
      %v1227 = vmul.f32 %v1189, 1.442695
      %v1228 = vpow.pop %v1227
      %v1229 = vmul.f32 %v1190, 1.442695
      %v1230 = vpow.pop %v1229
      %v1231 = vmul.f32 %v1191, 1.442695
      %v1232 = vpow.pop %v1231
      %v1233 = vmul.f32 %v1192, 1.442695
      %v1234 = vpow.pop %v1233
      %v1235 = vmul.f32 %v1193, 1.442695
      %v1236 = vpow.pop %v1235
      %v1237 = vmul.f32 %v1194, 1.442695
      %v1238 = vpow.pop %v1237
      %v1239 = vmul.f32 %v1195, 1.442695
      %v1240 = vpow.pop %v1239
      %v1241 = vmul.f32 %v1196, 1.442695
      %v1242 = vpow.pop %v1241
      %v1243 = vmul.f32 %v1197, 1.442695
      %v1244 = vpow.pop %v1243
      %v1245 = vmul.f32 %v1198, 1.442695
      %v1246 = vpow.pop %v1245
      %v1247 = vmul.f32 %v1199, 1.442695
      %v1248 = vpow.pop %v1247
      %v1249 = vmul.f32 %v1200, 1.442695
      %v1250 = vpow.pop %v1249
      %v1251 = vmul.f32 %v1201, 1.442695
      %v1252 = vpow.pop %v1251
      %v1253 = vmul.f32 %v1202, 1.442695
      %v1254 = vpow.pop %v1253
      %v1255 = vmul.f32 %v1203, 1.442695
      %v1256 = vpow.pop %v1255
      %v1257 = vmul.f32 %v1204, 1.442695
      %v1258 = vpow.pop %v1257
      %v1259 = vmul.f32 %v1205, 1.442695
      %v1260 = vpow.pop %v1259
      %v1261 = vmul.f32 %v1206, 1.442695
      %v1262 = vpow.pop %v1261
      %v1263 = vmul.f32 %v1207, 1.442695
      %v1264 = vpow.pop %v1263
      %v1265 = vmul.f32 %v1208, 1.442695
      %v1266 = vpow.pop %v1265
      %v1267 = vmul.f32 %v1209, 1.442695
      %v1268 = vpow.pop %v1267
      %v1269 = vmul.f32 %v1210, 1.442695
      %v1270 = vpow.pop %v1269
      %v1271 = vmul.f32 %v1211, 1.442695
      %v1272 = vpow.pop %v1271
      %v1273 = vmul.f32 %v1212, 1.442695
      %v1274 = vpow.pop %v1273
      %v1275 = vmul.f32 %v1213, 1.442695
      %v1276 = vpow.pop %v1275
      %v1277 = vmul.f32 %v1214, 1.442695
      %v1278 = vpow.pop %v1277
      %v1279 = vmul.f32 %v1119, %v1216
      %v1280 = vmul.f32 %v1120, %v1218
      %v1281 = vmul.f32 %v1121, %v1220
      %v1282 = vmul.f32 %v1122, %v1222
      %v1283 = vmul.f32 %v1123, %v1224
      %v1284 = vmul.f32 %v1124, %v1226
      %v1285 = vmul.f32 %v1125, %v1228
      %v1286 = vmul.f32 %v1126, %v1230
      %v1287 = vmul.f32 %v1127, %v1232
      %v1288 = vmul.f32 %v1128, %v1234
      %v1289 = vmul.f32 %v1129, %v1236
      %v1290 = vmul.f32 %v1130, %v1238
      %v1291 = vmul.f32 %v1131, %v1240
      %v1292 = vmul.f32 %v1132, %v1242
      %v1293 = vmul.f32 %v1133, %v1244
      %v1294 = vmul.f32 %v1134, %v1246
      %v1295 = vmul.f32 %v1135, %v1248
      %v1296 = vmul.f32 %v1136, %v1250
      %v1297 = vmul.f32 %v1137, %v1252
      %v1298 = vmul.f32 %v1138, %v1254
      %v1299 = vmul.f32 %v1139, %v1256
      %v1300 = vmul.f32 %v1140, %v1258
      %v1301 = vmul.f32 %v1141, %v1260
      %v1302 = vmul.f32 %v1142, %v1262
      %v1303 = vmul.f32 %v1143, %v1264
      %v1304 = vmul.f32 %v1144, %v1266
      %v1305 = vmul.f32 %v1145, %v1268
      %v1306 = vmul.f32 %v1146, %v1270
      %v1307 = vmul.f32 %v1147, %v1272
      %v1308 = vmul.f32 %v1148, %v1274
      %v1309 = vmul.f32 %v1149, %v1276
      %v1310 = vmul.f32 %v1150, %v1278
      %v1311 = vsub.f32 1.0, %v1279
      %v1312 = vsub.f32 1.0, %v1280
      %v1313 = vsub.f32 1.0, %v1281
      %v1314 = vsub.f32 1.0, %v1282
      %v1315 = vsub.f32 1.0, %v1283
      %v1316 = vsub.f32 1.0, %v1284
      %v1317 = vsub.f32 1.0, %v1285
      %v1318 = vsub.f32 1.0, %v1286
      %v1319 = vsub.f32 1.0, %v1287
      %v1320 = vsub.f32 1.0, %v1288
      %v1321 = vsub.f32 1.0, %v1289
      %v1322 = vsub.f32 1.0, %v1290
      %v1323 = vsub.f32 1.0, %v1291
      %v1324 = vsub.f32 1.0, %v1292
      %v1325 = vsub.f32 1.0, %v1293
      %v1326 = vsub.f32 1.0, %v1294
      %v1327 = vsub.f32 1.0, %v1295
      %v1328 = vsub.f32 1.0, %v1296
      %v1329 = vsub.f32 1.0, %v1297
      %v1330 = vsub.f32 1.0, %v1298
      %v1331 = vsub.f32 1.0, %v1299
      %v1332 = vsub.f32 1.0, %v1300
      %v1333 = vsub.f32 1.0, %v1301
      %v1334 = vsub.f32 1.0, %v1302
      %v1335 = vsub.f32 1.0, %v1303
      %v1336 = vsub.f32 1.0, %v1304
      %v1337 = vsub.f32 1.0, %v1305
      %v1338 = vsub.f32 1.0, %v1306
      %v1339 = vsub.f32 1.0, %v1307
      %v1340 = vsub.f32 1.0, %v1308
      %v1341 = vsub.f32 1.0, %v1309
      %v1342 = vsub.f32 1.0, %v1310
      %vm1343 = vcmp.lt.f32.partialorder %v671, 0.0
      %vm1344 = vcmp.lt.f32.partialorder %v672, 0.0
      %vm1345 = vcmp.lt.f32.partialorder %v673, 0.0
      %vm1346 = vcmp.lt.f32.partialorder %v674, 0.0
      %vm1347 = vcmp.lt.f32.partialorder %v675, 0.0
      %vm1348 = vcmp.lt.f32.partialorder %v676, 0.0
      %vm1349 = vcmp.lt.f32.partialorder %v677, 0.0
      %vm1350 = vcmp.lt.f32.partialorder %v678, 0.0
      %vm1351 = vcmp.lt.f32.partialorder %v679, 0.0
      %vm1352 = vcmp.lt.f32.partialorder %v680, 0.0
      %vm1353 = vcmp.lt.f32.partialorder %v681, 0.0
      %vm1354 = vcmp.lt.f32.partialorder %v682, 0.0
      %vm1355 = vcmp.lt.f32.partialorder %v683, 0.0
      %vm1356 = vcmp.lt.f32.partialorder %v684, 0.0
      %vm1357 = vcmp.lt.f32.partialorder %v685, 0.0
      %vm1358 = vcmp.lt.f32.partialorder %v686, 0.0
      %vm1359 = vcmp.lt.f32.partialorder %v687, 0.0
      %vm1360 = vcmp.lt.f32.partialorder %v688, 0.0
      %vm1361 = vcmp.lt.f32.partialorder %v689, 0.0
      %vm1362 = vcmp.lt.f32.partialorder %v690, 0.0
      %vm1363 = vcmp.lt.f32.partialorder %v691, 0.0
      %vm1364 = vcmp.lt.f32.partialorder %v692, 0.0
      %vm1365 = vcmp.lt.f32.partialorder %v693, 0.0
      %vm1366 = vcmp.lt.f32.partialorder %v694, 0.0
      %vm1367 = vcmp.lt.f32.partialorder %v695, 0.0
      %vm1368 = vcmp.lt.f32.partialorder %v696, 0.0
      %vm1369 = vcmp.lt.f32.partialorder %v697, 0.0
      %vm1370 = vcmp.lt.f32.partialorder %v698, 0.0
      %vm1371 = vcmp.lt.f32.partialorder %v699, 0.0
      %vm1372 = vcmp.lt.f32.partialorder %v700, 0.0
      %vm1373 = vcmp.lt.f32.partialorder %v701, 0.0
      %vm1374 = vcmp.lt.f32.partialorder %v702, 0.0
      %v1375 = vsub.f32 0.0, %v1311
      %v1376 = vsub.f32 0.0, %v1312
      %v1377 = vsub.f32 0.0, %v1313
      %v1378 = vsub.f32 0.0, %v1314
      %v1379 = vsub.f32 0.0, %v1315
      %v1380 = vsub.f32 0.0, %v1316
      %v1381 = vsub.f32 0.0, %v1317
      %v1382 = vsub.f32 0.0, %v1318
      %v1383 = vsub.f32 0.0, %v1319
      %v1384 = vsub.f32 0.0, %v1320
      %v1385 = vsub.f32 0.0, %v1321
      %v1386 = vsub.f32 0.0, %v1322
      %v1387 = vsub.f32 0.0, %v1323
      %v1388 = vsub.f32 0.0, %v1324
      %v1389 = vsub.f32 0.0, %v1325
      %v1390 = vsub.f32 0.0, %v1326
      %v1391 = vsub.f32 0.0, %v1327
      %v1392 = vsub.f32 0.0, %v1328
      %v1393 = vsub.f32 0.0, %v1329
      %v1394 = vsub.f32 0.0, %v1330
      %v1395 = vsub.f32 0.0, %v1331
      %v1396 = vsub.f32 0.0, %v1332
      %v1397 = vsub.f32 0.0, %v1333
      %v1398 = vsub.f32 0.0, %v1334
      %v1399 = vsub.f32 0.0, %v1335
      %v1400 = vsub.f32 0.0, %v1336
      %v1401 = vsub.f32 0.0, %v1337
      %v1402 = vsub.f32 0.0, %v1338
      %v1403 = vsub.f32 0.0, %v1339
      %v1404 = vsub.f32 0.0, %v1340
      %v1405 = vsub.f32 0.0, %v1341
      %v1406 = vsub.f32 0.0, %v1342
      %v1407 = vsel %vm1343, %v1375, %v1311
      %v1408 = vsel %vm1344, %v1376, %v1312
      %v1409 = vsel %vm1345, %v1377, %v1313
      %v1410 = vsel %vm1346, %v1378, %v1314
      %v1411 = vsel %vm1347, %v1379, %v1315
      %v1412 = vsel %vm1348, %v1380, %v1316
      %v1413 = vsel %vm1349, %v1381, %v1317
      %v1414 = vsel %vm1350, %v1382, %v1318
      %v1415 = vsel %vm1351, %v1383, %v1319
      %v1416 = vsel %vm1352, %v1384, %v1320
      %v1417 = vsel %vm1353, %v1385, %v1321
      %v1418 = vsel %vm1354, %v1386, %v1322
      %v1419 = vsel %vm1355, %v1387, %v1323
      %v1420 = vsel %vm1356, %v1388, %v1324
      %v1421 = vsel %vm1357, %v1389, %v1325
      %v1422 = vsel %vm1358, %v1390, %v1326
      %v1423 = vsel %vm1359, %v1391, %v1327
      %v1424 = vsel %vm1360, %v1392, %v1328
      %v1425 = vsel %vm1361, %v1393, %v1329
      %v1426 = vsel %vm1362, %v1394, %v1330
      %v1427 = vsel %vm1363, %v1395, %v1331
      %v1428 = vsel %vm1364, %v1396, %v1332
      %v1429 = vsel %vm1365, %v1397, %v1333
      %v1430 = vsel %vm1366, %v1398, %v1334
      %v1431 = vsel %vm1367, %v1399, %v1335
      %v1432 = vsel %vm1368, %v1400, %v1336
      %v1433 = vsel %vm1369, %v1401, %v1337
      %v1434 = vsel %vm1370, %v1402, %v1338
      %v1435 = vsel %vm1371, %v1403, %v1339
      %v1436 = vsel %vm1372, %v1404, %v1340
      %v1437 = vsel %vm1373, %v1405, %v1341
      %v1438 = vsel %vm1374, %v1406, %v1342
      %v1439 = vadd.f32 %v1407, 1.0
      %v1440 = vadd.f32 %v1408, 1.0
      %v1441 = vadd.f32 %v1409, 1.0
      %v1442 = vadd.f32 %v1410, 1.0
      %v1443 = vadd.f32 %v1411, 1.0
      %v1444 = vadd.f32 %v1412, 1.0
      %v1445 = vadd.f32 %v1413, 1.0
      %v1446 = vadd.f32 %v1414, 1.0
      %v1447 = vadd.f32 %v1415, 1.0
      %v1448 = vadd.f32 %v1416, 1.0
      %v1449 = vadd.f32 %v1417, 1.0
      %v1450 = vadd.f32 %v1418, 1.0
      %v1451 = vadd.f32 %v1419, 1.0
      %v1452 = vadd.f32 %v1420, 1.0
      %v1453 = vadd.f32 %v1421, 1.0
      %v1454 = vadd.f32 %v1422, 1.0
      %v1455 = vadd.f32 %v1423, 1.0
      %v1456 = vadd.f32 %v1424, 1.0
      %v1457 = vadd.f32 %v1425, 1.0
      %v1458 = vadd.f32 %v1426, 1.0
      %v1459 = vadd.f32 %v1427, 1.0
      %v1460 = vadd.f32 %v1428, 1.0
      %v1461 = vadd.f32 %v1429, 1.0
      %v1462 = vadd.f32 %v1430, 1.0
      %v1463 = vadd.f32 %v1431, 1.0
      %v1464 = vadd.f32 %v1432, 1.0
      %v1465 = vadd.f32 %v1433, 1.0
      %v1466 = vadd.f32 %v1434, 1.0
      %v1467 = vadd.f32 %v1435, 1.0
      %v1468 = vadd.f32 %v1436, 1.0
      %v1469 = vadd.f32 %v1437, 1.0
      %v1470 = vadd.f32 %v1438, 1.0
      %v1471 = vmul.f32 %v639, %v1439
      %v1472 = vmul.f32 %v640, %v1440
      %v1473 = vmul.f32 %v641, %v1441
      %v1474 = vmul.f32 %v642, %v1442
      %v1475 = vmul.f32 %v643, %v1443
      %v1476 = vmul.f32 %v644, %v1444
      %v1477 = vmul.f32 %v645, %v1445
      %v1478 = vmul.f32 %v646, %v1446
      %v1479 = vmul.f32 %v647, %v1447
      %v1480 = vmul.f32 %v648, %v1448
      %v1481 = vmul.f32 %v649, %v1449
      %v1482 = vmul.f32 %v650, %v1450
      %v1483 = vmul.f32 %v651, %v1451
      %v1484 = vmul.f32 %v652, %v1452
      %v1485 = vmul.f32 %v653, %v1453
      %v1486 = vmul.f32 %v654, %v1454
      %v1487 = vmul.f32 %v655, %v1455
      %v1488 = vmul.f32 %v656, %v1456
      %v1489 = vmul.f32 %v657, %v1457
      %v1490 = vmul.f32 %v658, %v1458
      %v1491 = vmul.f32 %v659, %v1459
      %v1492 = vmul.f32 %v660, %v1460
      %v1493 = vmul.f32 %v661, %v1461
      %v1494 = vmul.f32 %v662, %v1462
      %v1495 = vmul.f32 %v663, %v1463
      %v1496 = vmul.f32 %v664, %v1464
      %v1497 = vmul.f32 %v665, %v1465
      %v1498 = vmul.f32 %v666, %v1466
      %v1499 = vmul.f32 %v667, %v1467
      %v1500 = vmul.f32 %v668, %v1468
      %v1501 = vmul.f32 %v669, %v1469
      %v1502 = vmul.f32 %v670, %v1470
      %v1503 = vpack.c.bf16 %v1472, %v1471
      %v1504 = vpack.c.bf16 %v1474, %v1473
      %v1505 = vpack.c.bf16 %v1476, %v1475
      %v1506 = vpack.c.bf16 %v1478, %v1477
      %v1507 = vpack.c.bf16 %v1480, %v1479
      %v1508 = vpack.c.bf16 %v1482, %v1481
      %v1509 = vpack.c.bf16 %v1484, %v1483
      %v1510 = vpack.c.bf16 %v1486, %v1485
      %v1511 = vpack.c.bf16 %v1488, %v1487
      %v1512 = vpack.c.bf16 %v1490, %v1489
      %v1513 = vpack.c.bf16 %v1492, %v1491
      %v1514 = vpack.c.bf16 %v1494, %v1493
      %v1515 = vpack.c.bf16 %v1496, %v1495
      %v1516 = vpack.c.bf16 %v1498, %v1497
      %v1517 = vpack.c.bf16 %v1500, %v1499
      %v1518 = vpack.c.bf16 %v1502, %v1501
      %v1535 = vunpack.c.l.b16 %v1503
      %v1536 = vunpack.c.h.b16 %v1503
      %v1537 = vunpack.c.l.b16 %v1504
      %v1538 = vunpack.c.h.b16 %v1504
      %v1539 = vunpack.c.l.b16 %v1505
      %v1540 = vunpack.c.h.b16 %v1505
      %v1541 = vunpack.c.l.b16 %v1506
      %v1542 = vunpack.c.h.b16 %v1506
      %v1543 = vunpack.c.l.b16 %v1507
      %v1544 = vunpack.c.h.b16 %v1507
      %v1545 = vunpack.c.l.b16 %v1508
      %v1546 = vunpack.c.h.b16 %v1508
      %v1547 = vunpack.c.l.b16 %v1509
      %v1548 = vunpack.c.h.b16 %v1509
      %v1549 = vunpack.c.l.b16 %v1510
      %v1550 = vunpack.c.h.b16 %v1510
      %v1551 = vunpack.c.l.b16 %v1511
      %v1552 = vunpack.c.h.b16 %v1511
      %v1553 = vunpack.c.l.b16 %v1512
      %v1554 = vunpack.c.h.b16 %v1512
      %v1555 = vunpack.c.l.b16 %v1513
      %v1556 = vunpack.c.h.b16 %v1513
      %v1557 = vunpack.c.l.b16 %v1514
      %v1558 = vunpack.c.h.b16 %v1514
      %v1559 = vunpack.c.l.b16 %v1515
      %v1560 = vunpack.c.h.b16 %v1515
      %v1561 = vunpack.c.l.b16 %v1516
      %v1562 = vunpack.c.h.b16 %v1516
      %v1563 = vunpack.c.l.b16 %v1517
      %v1564 = vunpack.c.h.b16 %v1517
      %v1565 = vunpack.c.l.b16 %v1518
      %v1566 = vunpack.c.h.b16 %v1518
      %v1567 = vpack.c.b16 %v1535, %v1535
      %v1568 = vpack.c.b16 %v1536, %v1536
      %v1569 = vpack.c.b16 %v1537, %v1537
      %v1570 = vpack.c.b16 %v1538, %v1538
      %v1571 = vpack.c.b16 %v1539, %v1539
      %v1572 = vpack.c.b16 %v1540, %v1540
      %v1573 = vpack.c.b16 %v1541, %v1541
      %v1574 = vpack.c.b16 %v1542, %v1542
      %v1575 = vpack.c.b16 %v1543, %v1543
      %v1576 = vpack.c.b16 %v1544, %v1544
      %v1577 = vpack.c.b16 %v1545, %v1545
      %v1578 = vpack.c.b16 %v1546, %v1546
      %v1579 = vpack.c.b16 %v1547, %v1547
      %v1580 = vpack.c.b16 %v1548, %v1548
      %v1581 = vpack.c.b16 %v1549, %v1549
      %v1582 = vpack.c.b16 %v1550, %v1550
      %v1583 = vpack.c.b16 %v1551, %v1551
      %v1584 = vpack.c.b16 %v1552, %v1552
      %v1585 = vpack.c.b16 %v1553, %v1553
      %v1586 = vpack.c.b16 %v1554, %v1554
      %v1587 = vpack.c.b16 %v1555, %v1555
      %v1588 = vpack.c.b16 %v1556, %v1556
      %v1589 = vpack.c.b16 %v1557, %v1557
      %v1590 = vpack.c.b16 %v1558, %v1558
      %v1591 = vpack.c.b16 %v1559, %v1559
      %v1592 = vpack.c.b16 %v1560, %v1560
      %v1593 = vpack.c.b16 %v1561, %v1561
      %v1594 = vpack.c.b16 %v1562, %v1562
      %v1595 = vpack.c.b16 %v1563, %v1563
      %v1596 = vpack.c.b16 %v1564, %v1564
      %v1597 = vpack.c.b16 %v1565, %v1565
      %v1598 = vpack.c.b16 %v1566, %v1566
      %vm1631 = vcmask 60416
      %1632 = vst.msk [vmem:[%s275] sm:$0xf] %vm1631, %v1567
      %1633 = vst.msk [vmem:[%s275 + $0x4] sm:$0xf] %vm1631, %v1568
      %1634 = vst.msk [vmem:[%s275 + $0x8] sm:$0xf] %vm1631, %v1569
      %1635 = vst.msk [vmem:[%s275 + $0xc] sm:$0xf] %vm1631, %v1570
      %1636 = vst.msk [vmem:[%s275 + $0x10] sm:$0xf] %vm1631, %v1571
      %1637 = vst.msk [vmem:[%s275 + $0x14] sm:$0xf] %vm1631, %v1572
      %1638 = vst.msk [vmem:[%s275 + $0x18] sm:$0xf] %vm1631, %v1573
      %1639 = vst.msk [vmem:[%s275 + $0x1c] sm:$0xf] %vm1631, %v1574
      %1640 = vst.msk [vmem:[%s275 + $0x20] sm:$0xf] %vm1631, %v1575
      %1641 = vst.msk [vmem:[%s275 + $0x24] sm:$0xf] %vm1631, %v1576
      %1642 = vst.msk [vmem:[%s275 + $0x28] sm:$0xf] %vm1631, %v1577
      %1643 = vst.msk [vmem:[%s275 + $0x2c] sm:$0xf] %vm1631, %v1578
      %1644 = vst.msk [vmem:[%s275 + $0x30] sm:$0xf] %vm1631, %v1579
      %1645 = vst.msk [vmem:[%s275 + $0x34] sm:$0xf] %vm1631, %v1580
      %1646 = vst.msk [vmem:[%s275 + $0x38] sm:$0xf] %vm1631, %v1581
      %1647 = vst.msk [vmem:[%s275 + $0x3c] sm:$0xf] %vm1631, %v1582
      %1648 = vst.msk [vmem:[%s275 + $0x40] sm:$0xf] %vm1631, %v1583
      %1649 = vst.msk [vmem:[%s275 + $0x44] sm:$0xf] %vm1631, %v1584
      %1650 = vst.msk [vmem:[%s275 + $0x48] sm:$0xf] %vm1631, %v1585
      %1651 = vst.msk [vmem:[%s275 + $0x4c] sm:$0xf] %vm1631, %v1586
      %1652 = vst.msk [vmem:[%s275 + $0x50] sm:$0xf] %vm1631, %v1587
      %1653 = vst.msk [vmem:[%s275 + $0x54] sm:$0xf] %vm1631, %v1588
      %1654 = vst.msk [vmem:[%s275 + $0x58] sm:$0xf] %vm1631, %v1589
      %1655 = vst.msk [vmem:[%s275 + $0x5c] sm:$0xf] %vm1631, %v1590
      %1656 = vst.msk [vmem:[%s275 + $0x60] sm:$0xf] %vm1631, %v1591
      %1657 = vst.msk [vmem:[%s275 + $0x64] sm:$0xf] %vm1631, %v1592
      %1658 = vst.msk [vmem:[%s275 + $0x68] sm:$0xf] %vm1631, %v1593
      %1659 = vst.msk [vmem:[%s275 + $0x6c] sm:$0xf] %vm1631, %v1594
      %1660 = vst.msk [vmem:[%s275 + $0x70] sm:$0xf] %vm1631, %v1595
      %1661 = vst.msk [vmem:[%s275 + $0x74] sm:$0xf] %vm1631, %v1596
      %1662 = vst.msk [vmem:[%s275 + $0x78] sm:$0xf] %vm1631, %v1597
      %1663 = vst.msk [vmem:[%s275 + $0x7c] sm:$0xf] %vm1631, %v1598
      %vm1664 = vcmask 64512
      %v1665 = vsel %vm1664, %v1471, 0.0
      %v1666 = vsel %vm1664, %v1472, 0.0
      %v1667 = vadd.f32 %v1665, %v1666
      %v1668 = vsel %vm1664, %v1473, 0.0
      %v1669 = vadd.f32 %v1667, %v1668
      %v1670 = vsel %vm1664, %v1474, 0.0
      %v1671 = vadd.f32 %v1669, %v1670
      %v1672 = vsel %vm1664, %v1475, 0.0
      %v1673 = vadd.f32 %v1671, %v1672
      %v1674 = vsel %vm1664, %v1476, 0.0
      %v1675 = vadd.f32 %v1673, %v1674
      %v1676 = vsel %vm1664, %v1477, 0.0
      %v1677 = vadd.f32 %v1675, %v1676
      %v1678 = vsel %vm1664, %v1478, 0.0
      %v1679 = vadd.f32 %v1677, %v1678
      %v1680 = vsel %vm1664, %v1479, 0.0
      %v1681 = vadd.f32 %v1679, %v1680
      %v1682 = vsel %vm1664, %v1480, 0.0
      %v1683 = vadd.f32 %v1681, %v1682
      %v1684 = vsel %vm1664, %v1481, 0.0
      %v1685 = vadd.f32 %v1683, %v1684
      %v1686 = vsel %vm1664, %v1482, 0.0
      %v1687 = vadd.f32 %v1685, %v1686
      %v1688 = vsel %vm1664, %v1483, 0.0
      %v1689 = vadd.f32 %v1687, %v1688
      %v1690 = vsel %vm1664, %v1484, 0.0
      %v1691 = vadd.f32 %v1689, %v1690
      %v1692 = vsel %vm1664, %v1485, 0.0
      %v1693 = vadd.f32 %v1691, %v1692
      %v1694 = vsel %vm1664, %v1486, 0.0
      %v1695 = vadd.f32 %v1693, %v1694
      %v1696 = vsel %vm1664, %v1487, 0.0
      %v1697 = vadd.f32 %v1695, %v1696
      %v1698 = vsel %vm1664, %v1488, 0.0
      %v1699 = vadd.f32 %v1697, %v1698
      %v1700 = vsel %vm1664, %v1489, 0.0
      %v1701 = vadd.f32 %v1699, %v1700
      %v1702 = vsel %vm1664, %v1490, 0.0
      %v1703 = vadd.f32 %v1701, %v1702
      %v1704 = vsel %vm1664, %v1491, 0.0
      %v1705 = vadd.f32 %v1703, %v1704
      %v1706 = vsel %vm1664, %v1492, 0.0
      %v1707 = vadd.f32 %v1705, %v1706
      %v1708 = vsel %vm1664, %v1493, 0.0
      %v1709 = vadd.f32 %v1707, %v1708
      %v1710 = vsel %vm1664, %v1494, 0.0
      %v1711 = vadd.f32 %v1709, %v1710
      %v1712 = vsel %vm1664, %v1495, 0.0
      %v1713 = vadd.f32 %v1711, %v1712
      %v1714 = vsel %vm1664, %v1496, 0.0
      %v1715 = vadd.f32 %v1713, %v1714
      %v1716 = vsel %vm1664, %v1497, 0.0
      %v1717 = vadd.f32 %v1715, %v1716
      %v1718 = vsel %vm1664, %v1498, 0.0
      %v1719 = vadd.f32 %v1717, %v1718
      %v1720 = vsel %vm1664, %v1499, 0.0
      %v1721 = vadd.f32 %v1719, %v1720
      %v1722 = vsel %vm1664, %v1500, 0.0
      %v1723 = vadd.f32 %v1721, %v1722
      %v1724 = vsel %vm1664, %v1501, 0.0
      %v1725 = vadd.f32 %v1723, %v1724
      %v1726 = vsel %vm1664, %v1502, 0.0
      %v1727 = vadd.f32 %v1725, %v1726
      %v1728 = vmul.f32 %v1471, %v1471
      %v1729 = vmul.f32 %v1472, %v1472
      %v1730 = vmul.f32 %v1473, %v1473
      %v1731 = vmul.f32 %v1474, %v1474
      %v1732 = vmul.f32 %v1475, %v1475
      %v1733 = vmul.f32 %v1476, %v1476
      %v1734 = vmul.f32 %v1477, %v1477
      %v1735 = vmul.f32 %v1478, %v1478
      %v1736 = vmul.f32 %v1479, %v1479
      %v1737 = vmul.f32 %v1480, %v1480
      %v1738 = vmul.f32 %v1481, %v1481
      %v1739 = vmul.f32 %v1482, %v1482
      %v1740 = vmul.f32 %v1483, %v1483
      %v1741 = vmul.f32 %v1484, %v1484
      %v1742 = vmul.f32 %v1485, %v1485
      %v1743 = vmul.f32 %v1486, %v1486
      %v1744 = vmul.f32 %v1487, %v1487
      %v1745 = vmul.f32 %v1488, %v1488
      %v1746 = vmul.f32 %v1489, %v1489
      %v1747 = vmul.f32 %v1490, %v1490
      %v1748 = vmul.f32 %v1491, %v1491
      %v1749 = vmul.f32 %v1492, %v1492
      %v1750 = vmul.f32 %v1493, %v1493
      %v1751 = vmul.f32 %v1494, %v1494
      %v1752 = vmul.f32 %v1495, %v1495
      %v1753 = vmul.f32 %v1496, %v1496
      %v1754 = vmul.f32 %v1497, %v1497
      %v1755 = vmul.f32 %v1498, %v1498
      %v1756 = vmul.f32 %v1499, %v1499
      %v1757 = vmul.f32 %v1500, %v1500
      %v1758 = vmul.f32 %v1501, %v1501
      %v1759 = vmul.f32 %v1502, %v1502
      %v1760 = vsel %vm1664, %v1728, 0.0
      %v1761 = vsel %vm1664, %v1729, 0.0
      %v1762 = vadd.f32 %v1760, %v1761
      %v1763 = vsel %vm1664, %v1730, 0.0
      %v1764 = vadd.f32 %v1762, %v1763
      %v1765 = vsel %vm1664, %v1731, 0.0
      %v1766 = vadd.f32 %v1764, %v1765
      %v1767 = vsel %vm1664, %v1732, 0.0
      %v1768 = vadd.f32 %v1766, %v1767
      %v1769 = vsel %vm1664, %v1733, 0.0
      %v1770 = vadd.f32 %v1768, %v1769
      %v1771 = vsel %vm1664, %v1734, 0.0
      %v1772 = vadd.f32 %v1770, %v1771
      %v1773 = vsel %vm1664, %v1735, 0.0
      %v1774 = vadd.f32 %v1772, %v1773
      %v1775 = vsel %vm1664, %v1736, 0.0
      %v1776 = vadd.f32 %v1774, %v1775
      %v1777 = vsel %vm1664, %v1737, 0.0
      %v1778 = vadd.f32 %v1776, %v1777
      %v1779 = vsel %vm1664, %v1738, 0.0
      %v1780 = vadd.f32 %v1778, %v1779
      %v1781 = vsel %vm1664, %v1739, 0.0
      %v1782 = vadd.f32 %v1780, %v1781
      %v1783 = vsel %vm1664, %v1740, 0.0
      %v1784 = vadd.f32 %v1782, %v1783
      %v1785 = vsel %vm1664, %v1741, 0.0
      %v1786 = vadd.f32 %v1784, %v1785
      %v1787 = vsel %vm1664, %v1742, 0.0
      %v1788 = vadd.f32 %v1786, %v1787
      %v1789 = vsel %vm1664, %v1743, 0.0
      %v1790 = vadd.f32 %v1788, %v1789
      %v1791 = vsel %vm1664, %v1744, 0.0
      %v1792 = vadd.f32 %v1790, %v1791
      %v1793 = vsel %vm1664, %v1745, 0.0
      %v1794 = vadd.f32 %v1792, %v1793
      %v1795 = vsel %vm1664, %v1746, 0.0
      %v1796 = vadd.f32 %v1794, %v1795
      %v1797 = vsel %vm1664, %v1747, 0.0
      %v1798 = vadd.f32 %v1796, %v1797
      %v1799 = vsel %vm1664, %v1748, 0.0
      %v1800 = vadd.f32 %v1798, %v1799
      %v1801 = vsel %vm1664, %v1749, 0.0
      %v1802 = vadd.f32 %v1800, %v1801
      %v1803 = vsel %vm1664, %v1750, 0.0
      %v1804 = vadd.f32 %v1802, %v1803
      %v1805 = vsel %vm1664, %v1751, 0.0
      %v1806 = vadd.f32 %v1804, %v1805
      %v1807 = vsel %vm1664, %v1752, 0.0
      %v1808 = vadd.f32 %v1806, %v1807
      %v1809 = vsel %vm1664, %v1753, 0.0
      %v1810 = vadd.f32 %v1808, %v1809
      %v1811 = vsel %vm1664, %v1754, 0.0
      %v1812 = vadd.f32 %v1810, %v1811
      %v1813 = vsel %vm1664, %v1755, 0.0
      %v1814 = vadd.f32 %v1812, %v1813
      %v1815 = vsel %vm1664, %v1756, 0.0
      %v1816 = vadd.f32 %v1814, %v1815
      %v1817 = vsel %vm1664, %v1757, 0.0
      %v1818 = vadd.f32 %v1816, %v1817
      %v1819 = vsel %vm1664, %v1758, 0.0
      %v1820 = vadd.f32 %v1818, %v1819
      %v1821 = vsel %vm1664, %v1759, 0.0
      %v1822 = vadd.f32 %v1820, %v1821
      %p1823 = scmp.eq.s32.totalorder %s22, 0
      // Predicated region
      $region33: #{resnet_block_forward.2} parent=31 // pred_check
        %p1824 = pneg %p1823
      $region34: #{resnet_block_forward.2} parent=31 // pred_check_branch
        %1826 = sbr.rel (%p1824) target = $region36
      $region35: #{resnet_block_forward.2} parent=31 // pred_region
        %1827 = vst.msk [vmem:[%s280] sm:$0xff] %vm1664, 0.0
        %1828 = vst.msk [vmem:[%s284] sm:$0xff] %vm1664, 0.0
      $region36: #{resnet_block_forward.2} parent=31 // pred_fallthru
        _
      %v1829 = vld [vmem:[%s280] sm:$0xff]
      %v1830 = vadd.f32 %v1829, %v1727
      %1831 = vst.msk [vmem:[%s280] sm:$0xff] %vm1664, %v1830
      %v1832 = vld [vmem:[%s284] sm:$0xff]
      %v1833 = vadd.f32 %v1832, %v1822
      %1834 = vst.msk [vmem:[%s284] sm:$0xff] %vm1664, %v1833
      %s1835 = smul.u32 32, %s22
      %p1836 = scmp.lt.s32.totalorder %s21, 1
      %s1837 = scalar_select %p1836, %s21, 1
      %p1838 = scmp.lt.s32.totalorder %s1835, 31
      %s1839 = scalar_select %p1838, %s1835, 31
      %s1840 = smul.addr %s1837, 32
      %s1841 = sadd.s32 %s1839, %s1840
      %s1842 = smul.addr %s1841, 4
      %s1843 = scalar_lea.vmem %s3, %s1842
      %p1844 = scmp.lt.s32.totalorder %s21, 1
      %s1845 = scalar_select %p1844, %s21, 1
      %s1846 = smul.addr %s1845, 8
      %s1847 = scalar_lea.vmem %s4, %s1846
      %p1848 = scmp.lt.s32.totalorder %s21, 1
      %s1849 = scalar_select %p1848, %s21, 1
      %s1850 = smul.addr %s1849, 8
      %s1851 = scalar_lea.vmem %s5, %s1850
      // Predicated region
      $region37: #{resnet_block_forward.2} parent=31 // pred_check
        %p1852 = pneg %p119
      $region38: #{resnet_block_forward.2} parent=31 // pred_check_branch
        %1854 = sbr.rel (%p1852) target = $region40
      $region39: #{resnet_block_forward.2} parent=31 // pred_region
        %s1855 = smul.u32 32, %s22
      $region40: #{resnet_block_forward.2} parent=31 // pred_fallthru
        _
      // Predicated region
      $region41: #{resnet_block_forward.2} parent=31 // pred_check
        %p1856 = pneg %p145
      $region42: #{resnet_block_forward.2} parent=31 // pred_check_branch
        %1858 = sbr.rel (%p1856) target = $region44
      $region43: #{resnet_block_forward.2} parent=31 // pred_region
        _
      $region44: #{resnet_block_forward.2} parent=31 // pred_fallthru
        _
      // Predicated region
      $region45: #{resnet_block_forward.2} parent=31 // pred_check
        %p1859 = pneg %p171
      $region46: #{resnet_block_forward.2} parent=31 // pred_check_branch
        %1861 = sbr.rel (%p1859) target = $region48
      $region47: #{resnet_block_forward.2} parent=31 // pred_region
        _
      $region48: #{resnet_block_forward.2} parent=31 // pred_fallthru
        _
    $region32: #{resnet_block_forward.2} parent=5 // pred_fallthru
      _
    %p1862 = scmp.le.s32.totalorder 2, %s12
    // Predicated region
    $region49: #{resnet_block_forward.2} parent=5 // pred_check
      %p1863 = pneg %p1862
    $region50: #{resnet_block_forward.2} parent=5 // pred_check_branch
      %1865 = sbr.rel (%p1863) target = $region52
    $region51: #{resnet_block_forward.2} parent=5 // pred_region
      %s1866 = ssub.s32 %s12, 2
      // Predicated region
      $region53: #{resnet_block_forward.2} parent=51 // pred_check
        %p1867 = pneg %p125
      $region54: #{resnet_block_forward.2} parent=51 // pred_check_branch
        %1869 = sbr.rel (%p1867) target = $region56
      $region55: #{resnet_block_forward.2} parent=51 // pred_region
        %s1870 = smul.u32 32, %s24
        %p1871 = scmp.lt.s32.totalorder %s23, 1
        %s1872 = scalar_select %p1871, %s23, 1
        %p1873 = scmp.lt.s32.totalorder %s1870, 31
        %s1874 = scalar_select %p1873, %s1870, 31
        %s1875 = smul.addr %s1872, 32
        %s1876 = sadd.s32 %s1874, %s1875
        %s1877 = smul.addr %s1876, 4
        %s1878 = scalar_lea.vmem %s3, %s1877
      $region56: #{resnet_block_forward.2} parent=51 // pred_fallthru
        _
      // Predicated region
      $region57: #{resnet_block_forward.2} parent=51 // pred_check
        %p1879 = pneg %p151
      $region58: #{resnet_block_forward.2} parent=51 // pred_check_branch
        %1881 = sbr.rel (%p1879) target = $region60
      $region59: #{resnet_block_forward.2} parent=51 // pred_region
        %p1882 = scmp.lt.s32.totalorder %s23, 1
        %s1883 = scalar_select %p1882, %s23, 1
        %s1884 = smul.addr %s1883, 8
        %s1885 = scalar_lea.vmem %s4, %s1884
      $region60: #{resnet_block_forward.2} parent=51 // pred_fallthru
        _
      // Predicated region
      $region61: #{resnet_block_forward.2} parent=51 // pred_check
        %p1886 = pneg %p177
      $region62: #{resnet_block_forward.2} parent=51 // pred_check_branch
        %1888 = sbr.rel (%p1886) target = $region64
      $region63: #{resnet_block_forward.2} parent=51 // pred_region
        %p1889 = scmp.lt.s32.totalorder %s23, 1
        %s1890 = scalar_select %p1889, %s23, 1
        %s1891 = smul.addr %s1890, 8
        %s1892 = scalar_lea.vmem %s5, %s1891
      $region64: #{resnet_block_forward.2} parent=51 // pred_fallthru
        _
    $region52: #{resnet_block_forward.2} parent=5 // pred_fallthru
      _
  $region6: #{resnet_block_forward.2} parent=0 // loop_footer
    %s16 = sadd.s32 1, %s12
  $region7: #{resnet_block_forward.2} parent=0 // loop_footer_branch
    %11 = sbr.rel target = $region3
  $region8: #{resnet_block_forward.2} parent=0 // loop_exit
    _

// kernel: resnet_block_forward.3
$region0: #{resnet_block_forward.3}
  #allocation0 [shape = 'u32[]', space=smem, size = 0x4, offset = 0x4, fixed_abs, tag = 'smem constant byte address 0x4 - core index']
  #allocation1 [shape = 'u32[144,128]{1,0:T(1,128)}', space=vmem, size = 0x12000, scoped, tag = 'internal scratch']
  %s0 = inlined_call_operand.vmem [shape: bf16[512,72], index: 0, kind: input, shape index: {}]
  %s1 = inlined_call_operand.vmem [shape: bf16[512,4], index: 1, kind: input, shape index: {}]
  %s2 = inlined_call_operand.vmem [shape: bf16[72,8], index: 2, kind: input, shape index: {}]
  %s3 = inlined_call_operand.vmem [shape: bf16[4,8], index: 3, kind: input, shape index: {}]
  %s4 = inlined_call_operand.vmem [shape: f32[1,8], index: 4, kind: input, shape index: {}]
  %s5 = inlined_call_operand.vmem [shape: f32[512,8], index: 5, kind: output, shape index: {}]
  %s6 = sld [smem:[#allocation0]]
  $region53: #{resnet_block_forward.3} parent=0
    _
  %s8 = ssub.s32 1, %s6
  %s9 = scalar_select 0, %s8, %s6
  loop: start=0, step=1, limit=4
  $region2: #{resnet_block_forward.3} parent=0 // loop_pre_header
    _
  $region3: #{resnet_block_forward.3} parent=0 // loop_header
    %s11 = sphi 0, %s15
    %p12 = scmp.ge.s32.totalorder %s11, 4
    %s21 = sphi 0, %s23
    %s24 = sphi 0, %s21
    %s25 = sphi 0, %s24
    %s41 = sphi 0, %s25
    %s47 = sphi 0, %s49
    %s50 = sphi 0, %s47
    %s51 = sphi 0, %s50
    %s67 = sphi 0, %s51
    %s71 = sphi 0, %s71
    %s73 = sphi 0, %s71
    %s74 = sphi 0, %s73
    %s88 = sphi 0, %s74
    %s92 = sphi 0, %s92
    %s94 = sphi 0, %s92
    %s95 = sphi 0, %s94
    %s109 = sphi 0, %s95
    %s113 = sphi 0, %s113
    %s115 = sphi 0, %s113
    %s116 = sphi 0, %s115
    %s130 = sphi 0, %s116
    %s136 = sphi 0, %s138
    %s139 = sphi 0, %s136
    %s140 = sphi 0, %s139
    %s156 = sphi 0, %s140
  $region4: #{resnet_block_forward.3} parent=0 // loop_header_branch
    %14 = sbr.rel (%p12) target = $region8
  $region5: #{resnet_block_forward.3} parent=0 // loop_body
    %s16 = ssub.s32 %s11, 1
    %s17 = ssub.s32 %s11, 2
    %s18 = sadd.s32 %s11, 1
    %s19 = ssub.s32 %s11, %s18
    %p20 = scmp.eq.s32.totalorder %s19, 0
    %s22 = sadd.s32 %s21, 1
    %s23 = scalar_select %p20, %s21, %s22
    %p26 = pneg %p20
    %p27 = scmp.eq.s32.totalorder %s11, 1
    %p28 = por %p26, %p27
    %p29 = scmp.ne.s32.totalorder %s21, %s24
    %p30 = scmp.eq.s32.totalorder %s11, 0
    %p31 = por %p29, %p30
    %p32 = scmp.ne.s32.totalorder %s21, %s24
    %p33 = scmp.eq.s32.totalorder %s16, 1
    %p34 = por %p32, %p33
    %p35 = scmp.ne.s32.totalorder %s24, %s25
    %p36 = scmp.eq.s32.totalorder %s16, 0
    %p37 = por %p35, %p36
    %p38 = scmp.ne.s32.totalorder %s24, %s25
    %p39 = scmp.eq.s32.totalorder %s17, 1
    %p40 = por %p38, %p39
    %p42 = scmp.ne.s32.totalorder %s25, %s41
    %p43 = scmp.eq.s32.totalorder %s17, 0
    %p44 = por %p42, %p43
    %s45 = ssub.s32 %s11, %s18
    %p46 = scmp.eq.s32.totalorder %s45, 0
    %s48 = sadd.s32 %s47, 1
    %s49 = scalar_select %p46, %s47, %s48
    %p52 = pneg %p46
    %p53 = scmp.eq.s32.totalorder %s11, 1
    %p54 = por %p52, %p53
    %p55 = scmp.ne.s32.totalorder %s47, %s50
    %p56 = scmp.eq.s32.totalorder %s11, 0
    %p57 = por %p55, %p56
    %p58 = scmp.ne.s32.totalorder %s47, %s50
    %p59 = scmp.eq.s32.totalorder %s16, 1
    %p60 = por %p58, %p59
    %p61 = scmp.ne.s32.totalorder %s50, %s51
    %p62 = scmp.eq.s32.totalorder %s16, 0
    %p63 = por %p61, %p62
    %p64 = scmp.ne.s32.totalorder %s50, %s51
    %p65 = scmp.eq.s32.totalorder %s17, 1
    %p66 = por %p64, %p65
    %p68 = scmp.ne.s32.totalorder %s51, %s67
    %p69 = scmp.eq.s32.totalorder %s17, 0
    %p70 = por %p68, %p69
    %s72 = sadd.s32 %s71, 1
    %p75 = scmp.eq.s32.totalorder %s11, 1
    %p76 = scmp.ne.s32.totalorder %s71, %s73
    %p77 = scmp.eq.s32.totalorder %s11, 0
    %p78 = por %p76, %p77
    %p79 = scmp.ne.s32.totalorder %s71, %s73
    %p80 = scmp.eq.s32.totalorder %s16, 1
    %p81 = por %p79, %p80
    %p82 = scmp.ne.s32.totalorder %s73, %s74
    %p83 = scmp.eq.s32.totalorder %s16, 0
    %p84 = por %p82, %p83
    %p85 = scmp.ne.s32.totalorder %s73, %s74
    %p86 = scmp.eq.s32.totalorder %s17, 1
    %p87 = por %p85, %p86
    %p89 = scmp.ne.s32.totalorder %s74, %s88
    %p90 = scmp.eq.s32.totalorder %s17, 0
    %p91 = por %p89, %p90
    %s93 = sadd.s32 %s92, 1
    %p96 = scmp.eq.s32.totalorder %s11, 1
    %p97 = scmp.ne.s32.totalorder %s92, %s94
    %p98 = scmp.eq.s32.totalorder %s11, 0
    %p99 = por %p97, %p98
    %p100 = scmp.ne.s32.totalorder %s92, %s94
    %p101 = scmp.eq.s32.totalorder %s16, 1
    %p102 = por %p100, %p101
    %p103 = scmp.ne.s32.totalorder %s94, %s95
    %p104 = scmp.eq.s32.totalorder %s16, 0
    %p105 = por %p103, %p104
    %p106 = scmp.ne.s32.totalorder %s94, %s95
    %p107 = scmp.eq.s32.totalorder %s17, 1
    %p108 = por %p106, %p107
    %p110 = scmp.ne.s32.totalorder %s95, %s109
    %p111 = scmp.eq.s32.totalorder %s17, 0
    %p112 = por %p110, %p111
    %s114 = sadd.s32 %s113, 1
    %p117 = scmp.eq.s32.totalorder %s11, 1
    %p118 = scmp.ne.s32.totalorder %s113, %s115
    %p119 = scmp.eq.s32.totalorder %s11, 0
    %p120 = por %p118, %p119
    %p121 = scmp.ne.s32.totalorder %s113, %s115
    %p122 = scmp.eq.s32.totalorder %s16, 1
    %p123 = por %p121, %p122
    %p124 = scmp.ne.s32.totalorder %s115, %s116
    %p125 = scmp.eq.s32.totalorder %s16, 0
    %p126 = por %p124, %p125
    %p127 = scmp.ne.s32.totalorder %s115, %s116
    %p128 = scmp.eq.s32.totalorder %s17, 1
    %p129 = por %p127, %p128
    %p131 = scmp.ne.s32.totalorder %s116, %s130
    %p132 = scmp.eq.s32.totalorder %s17, 0
    %p133 = por %p131, %p132
    %s134 = ssub.s32 %s11, %s18
    %p135 = scmp.eq.s32.totalorder %s134, 0
    %s137 = sadd.s32 %s136, 1
    %s138 = scalar_select %p135, %s136, %s137
    %p141 = pneg %p135
    %p142 = scmp.eq.s32.totalorder %s11, 1
    %p143 = por %p141, %p142
    %p144 = scmp.ne.s32.totalorder %s136, %s139
    %p145 = scmp.eq.s32.totalorder %s11, 0
    %p146 = por %p144, %p145
    %p147 = scmp.ne.s32.totalorder %s136, %s139
    %p148 = scmp.eq.s32.totalorder %s16, 1
    %p149 = por %p147, %p148
    %p150 = scmp.ne.s32.totalorder %s139, %s140
    %p151 = scmp.eq.s32.totalorder %s16, 0
    %p152 = por %p150, %p151
    %p153 = scmp.ne.s32.totalorder %s139, %s140
    %p154 = scmp.eq.s32.totalorder %s17, 1
    %p155 = por %p153, %p154
    %p157 = scmp.ne.s32.totalorder %s140, %s156
    %p158 = scmp.eq.s32.totalorder %s17, 0
    %p159 = por %p157, %p158
    %p160 = scmp.le.s32.totalorder 1, %s11
    %p161 = scmp.lt.s32.totalorder %s11, 3
    %p162 = pnand %p160, %p161
    %p163 = pneg %p162
    // Predicated region
    $region9: #{resnet_block_forward.3} parent=5 // pred_check
      _
    $region10: #{resnet_block_forward.3} parent=5 // pred_check_branch
      %165 = sbr.rel (%p162) target = $region12
    $region11: #{resnet_block_forward.3} parent=5 // pred_region
      %s166 = ssub.s32 %s11, 1
      // Predicated region
      $region13: #{resnet_block_forward.3} parent=11 // pred_check
        %p167 = pneg %p84
      $region14: #{resnet_block_forward.3} parent=11 // pred_check_branch
        %169 = sbr.rel (%p167) target = $region16
      $region15: #{resnet_block_forward.3} parent=11 // pred_region
        _
      $region16: #{resnet_block_forward.3} parent=11 // pred_fallthru
        _
      // Predicated region
      $region17: #{resnet_block_forward.3} parent=11 // pred_check
        %p170 = pneg %p105
      $region18: #{resnet_block_forward.3} parent=11 // pred_check_branch
        %172 = sbr.rel (%p170) target = $region20
      $region19: #{resnet_block_forward.3} parent=11 // pred_region
        _
      $region20: #{resnet_block_forward.3} parent=11 // pred_fallthru
        _
      // Predicated region
      $region21: #{resnet_block_forward.3} parent=11 // pred_check
        %p173 = pneg %p126
      $region22: #{resnet_block_forward.3} parent=11 // pred_check_branch
        %175 = sbr.rel (%p173) target = $region24
      $region23: #{resnet_block_forward.3} parent=11 // pred_region
        _
      $region24: #{resnet_block_forward.3} parent=11 // pred_fallthru
        _
    $region12: #{resnet_block_forward.3} parent=5 // pred_fallthru
      _
    %p176 = scmp.lt.s32.totalorder %s11, 2
    // Predicated region
    $region25: #{resnet_block_forward.3} parent=5 // pred_check
      %p177 = pneg %p176
    $region26: #{resnet_block_forward.3} parent=5 // pred_check_branch
      %179 = sbr.rel (%p177) target = $region28
    $region27: #{resnet_block_forward.3} parent=5 // pred_region
      // Predicated region
      $region29: #{resnet_block_forward.3} parent=27 // pred_check
        %p180 = pneg %p31
      $region30: #{resnet_block_forward.3} parent=27 // pred_check_branch
        %182 = sbr.rel (%p180) target = $region32
      $region31: #{resnet_block_forward.3} parent=27 // pred_region
        %s183 = smul.u32 32, %s11
        %p184 = scmp.lt.s32.totalorder %s183, 63
        %s185 = scalar_select %p184, %s183, 63
        %s186 = smul.addr %s185, 4
        %s187 = scalar_lea.vmem %s0, %s186
        %s188 = smul.u32 32, %s11
      $region32: #{resnet_block_forward.3} parent=27 // pred_fallthru
        _
      // Predicated region
      $region33: #{resnet_block_forward.3} parent=27 // pred_check
        %p189 = pneg %p57
      $region34: #{resnet_block_forward.3} parent=27 // pred_check_branch
        %191 = sbr.rel (%p189) target = $region36
      $region35: #{resnet_block_forward.3} parent=27 // pred_region
        %s192 = smul.u32 32, %s11
        %p193 = scmp.lt.s32.totalorder %s192, 63
        %s194 = scalar_select %p193, %s192, 63
        %s195 = smul.addr %s194, 4
        %s196 = scalar_lea.vmem %s1, %s195
        %s197 = smul.u32 32, %s11
      $region36: #{resnet_block_forward.3} parent=27 // pred_fallthru
        _
    $region28: #{resnet_block_forward.3} parent=5 // pred_fallthru
      _
    %p198 = scmp.le.s32.totalorder 1, %s11
    %p199 = scmp.lt.s32.totalorder %s11, 3
    %p200 = pnand %p198, %p199
    %p201 = pneg %p200
    // Predicated region
    $region37: #{resnet_block_forward.3} parent=5 // pred_check
      _
    $region38: #{resnet_block_forward.3} parent=5 // pred_check_branch
      %203 = sbr.rel (%p200) target = $region40
    $region39: #{resnet_block_forward.3} parent=5 // pred_region
      %s204 = ssub.s32 %s11, 1
      %s205 = smul.u32 32, %s16
      %p206 = scmp.lt.s32.totalorder %s205, 63
      %s207 = scalar_select %p206, %s205, 63
      %s208 = smul.addr %s207, 4
      %s209 = scalar_lea.vmem %s0, %s208
      %p210 = pneg %p37
      %p211 = pneg %p34
      %s212 = smul.u32 32, %s16
      %p213 = scmp.lt.s32.totalorder %s212, 63
      %s214 = scalar_select %p213, %s212, 63
      %s215 = smul.addr %s214, 4
      %s216 = scalar_lea.vmem %s1, %s215
      %p217 = pneg %p63
      %p218 = pneg %p60
      %p219 = pneg %p84
      %p220 = pneg %p81
      %p221 = pneg %p105
      %p222 = pneg %p102
      %p223 = pneg %p126
      %p224 = pneg %p123
      %p225 = pneg %p152
      %p226 = pneg %p149
      %s227 = smul.u32 32, %s16
      %p228 = scmp.lt.s32.totalorder %s227, 63
      %s229 = scalar_select %p228, %s227, 63
      %s230 = smul.addr %s229, 8
      %s231 = scalar_lea.vmem %s5, %s230
      %s232 = smul.u32 32, %s16
      %p233 = scmp.lt.s32.totalorder %s232, 63
      %s234 = scalar_select %p233, %s232, 63
      %s235 = smul.addr %s234, 4
      %s236 = scalar_lea.vmem %s0, %s235
      %s237 = smul.u32 32, %s16
      %s238 = smul.u32 32, %s16
      %p239 = scmp.lt.s32.totalorder %s238, 63
      %s240 = scalar_select %p239, %s238, 63
      %s241 = smul.addr %s240, 4
      %s242 = scalar_lea.vmem %s1, %s241
      %s243 = smul.u32 32, %s16
      %s244 = smul.u32 32, %s16
      %p245 = scmp.lt.s32.totalorder %s244, 63
      %s246 = scalar_select %p245, %s244, 63
      %s247 = smul.addr %s246, 8
      %s248 = scalar_lea.vmem %s5, %s247
      %s249 = smul.u32 32, %s16
      %v251 = vld [vmem:[%s236] sm:$0xf]
      %v252 = vld [vmem:[%s236 + $0x4] sm:$0xf]
      %v253 = vld [vmem:[%s236 + $0x8] sm:$0xf]
      %v254 = vld [vmem:[%s236 + $0xc] sm:$0xf]
      %v255 = vld [vmem:[%s236 + $0x10] sm:$0xf]
      %v256 = vld [vmem:[%s236 + $0x14] sm:$0xf]
      %v257 = vld [vmem:[%s236 + $0x18] sm:$0xf]
      %v258 = vld [vmem:[%s236 + $0x1c] sm:$0xf]
      %v259 = vld [vmem:[%s236 + $0x20] sm:$0xf]
      %v260 = vld [vmem:[%s236 + $0x24] sm:$0xf]
      %v261 = vld [vmem:[%s236 + $0x28] sm:$0xf]
      %v262 = vld [vmem:[%s236 + $0x2c] sm:$0xf]
      %v263 = vld [vmem:[%s236 + $0x30] sm:$0xf]
      %v264 = vld [vmem:[%s236 + $0x34] sm:$0xf]
      %v265 = vld [vmem:[%s236 + $0x38] sm:$0xf]
      %v266 = vld [vmem:[%s236 + $0x3c] sm:$0xf]
      %v267 = vld [vmem:[%s236 + $0x40] sm:$0xf]
      %v268 = vld [vmem:[%s236 + $0x44] sm:$0xf]
      %v269 = vld [vmem:[%s236 + $0x48] sm:$0xf]
      %v270 = vld [vmem:[%s236 + $0x4c] sm:$0xf]
      %v271 = vld [vmem:[%s236 + $0x50] sm:$0xf]
      %v272 = vld [vmem:[%s236 + $0x54] sm:$0xf]
      %v273 = vld [vmem:[%s236 + $0x58] sm:$0xf]
      %v274 = vld [vmem:[%s236 + $0x5c] sm:$0xf]
      %v275 = vld [vmem:[%s236 + $0x60] sm:$0xf]
      %v276 = vld [vmem:[%s236 + $0x64] sm:$0xf]
      %v277 = vld [vmem:[%s236 + $0x68] sm:$0xf]
      %v278 = vld [vmem:[%s236 + $0x6c] sm:$0xf]
      %v279 = vld [vmem:[%s236 + $0x70] sm:$0xf]
      %v280 = vld [vmem:[%s236 + $0x74] sm:$0xf]
      %v281 = vld [vmem:[%s236 + $0x78] sm:$0xf]
      %v282 = vld [vmem:[%s236 + $0x7c] sm:$0xf]
      %v283 = vld [vmem:[%s2] sm:$0xf]
      %v284 = vld [vmem:[%s2 + $0x4] sm:$0xf]
      %v285 = vld [vmem:[%s2 + $0x8] sm:$0xf]
      %v286 = vld [vmem:[%s2 + $0xc] sm:$0xf]
      %v287 = vld [vmem:[%s2 + $0x10] sm:$0xf]
      %v288 = vld [vmem:[%s2 + $0x14] sm:$0xf]
      %v289 = vld [vmem:[%s2 + $0x18] sm:$0xf]
      %v290 = vld [vmem:[%s2 + $0x1c] sm:$0xf]
      %v291 = vld [vmem:[%s2 + $0x20] sm:$0xf]
      %v292 = vld [vmem:[%s242] sm:$0xf]
      %v293 = vld [vmem:[%s242 + $0x4] sm:$0xf]
      %v294 = vld [vmem:[%s242 + $0x8] sm:$0xf]
      %v295 = vld [vmem:[%s242 + $0xc] sm:$0xf]
      %v296 = vld [vmem:[%s242 + $0x10] sm:$0xf]
      %v297 = vld [vmem:[%s242 + $0x14] sm:$0xf]
      %v298 = vld [vmem:[%s242 + $0x18] sm:$0xf]
      %v299 = vld [vmem:[%s242 + $0x1c] sm:$0xf]
      %v300 = vld [vmem:[%s242 + $0x20] sm:$0xf]
      %v301 = vld [vmem:[%s242 + $0x24] sm:$0xf]
      %v302 = vld [vmem:[%s242 + $0x28] sm:$0xf]
      %v303 = vld [vmem:[%s242 + $0x2c] sm:$0xf]
      %v304 = vld [vmem:[%s242 + $0x30] sm:$0xf]
      %v305 = vld [vmem:[%s242 + $0x34] sm:$0xf]
      %v306 = vld [vmem:[%s242 + $0x38] sm:$0xf]
      %v307 = vld [vmem:[%s242 + $0x3c] sm:$0xf]
      %v308 = vld [vmem:[%s242 + $0x40] sm:$0xf]
      %v309 = vld [vmem:[%s242 + $0x44] sm:$0xf]
      %v310 = vld [vmem:[%s242 + $0x48] sm:$0xf]
      %v311 = vld [vmem:[%s242 + $0x4c] sm:$0xf]
      %v312 = vld [vmem:[%s242 + $0x50] sm:$0xf]
      %v313 = vld [vmem:[%s242 + $0x54] sm:$0xf]
      %v314 = vld [vmem:[%s242 + $0x58] sm:$0xf]
      %v315 = vld [vmem:[%s242 + $0x5c] sm:$0xf]
      %v316 = vld [vmem:[%s242 + $0x60] sm:$0xf]
      %v317 = vld [vmem:[%s242 + $0x64] sm:$0xf]
      %v318 = vld [vmem:[%s242 + $0x68] sm:$0xf]
      %v319 = vld [vmem:[%s242 + $0x6c] sm:$0xf]
      %v320 = vld [vmem:[%s242 + $0x70] sm:$0xf]
      %v321 = vld [vmem:[%s242 + $0x74] sm:$0xf]
      %v322 = vld [vmem:[%s242 + $0x78] sm:$0xf]
      %v323 = vld [vmem:[%s242 + $0x7c] sm:$0xf]
      %v324 = vld [vmem:[%s3] sm:$0x3]
      %v357 = vunpack.c.l.b16 %v292
      %v358 = vunpack.c.l.b16 %v293
      %v359 = vunpack.c.l.b16 %v294
      %v360 = vunpack.c.l.b16 %v295
      %v361 = vunpack.c.l.b16 %v296
      %v362 = vunpack.c.l.b16 %v297
      %v363 = vunpack.c.l.b16 %v298
      %v364 = vunpack.c.l.b16 %v299
      %v365 = vunpack.c.l.b16 %v300
      %v366 = vunpack.c.l.b16 %v301
      %v367 = vunpack.c.l.b16 %v302
      %v368 = vunpack.c.l.b16 %v303
      %v369 = vunpack.c.l.b16 %v304
      %v370 = vunpack.c.l.b16 %v305
      %v371 = vunpack.c.l.b16 %v306
      %v372 = vunpack.c.l.b16 %v307
      %v373 = vunpack.c.l.b16 %v308
      %v374 = vunpack.c.l.b16 %v309
      %v375 = vunpack.c.l.b16 %v310
      %v376 = vunpack.c.l.b16 %v311
      %v377 = vunpack.c.l.b16 %v312
      %v378 = vunpack.c.l.b16 %v313
      %v379 = vunpack.c.l.b16 %v314
      %v380 = vunpack.c.l.b16 %v315
      %v381 = vunpack.c.l.b16 %v316
      %v382 = vunpack.c.l.b16 %v317
      %v383 = vunpack.c.l.b16 %v318
      %v384 = vunpack.c.l.b16 %v319
      %v385 = vunpack.c.l.b16 %v320
      %v386 = vunpack.c.l.b16 %v321
      %v387 = vunpack.c.l.b16 %v322
      %v388 = vunpack.c.l.b16 %v323
      %v389 = vpack.c.b16 %v358, %v357
      %v390 = vpack.c.b16 %v360, %v359
      %v391 = vpack.c.b16 %v362, %v361
      %v392 = vpack.c.b16 %v364, %v363
      %v393 = vpack.c.b16 %v366, %v365
      %v394 = vpack.c.b16 %v368, %v367
      %v395 = vpack.c.b16 %v370, %v369
      %v396 = vpack.c.b16 %v372, %v371
      %v397 = vpack.c.b16 %v374, %v373
      %v398 = vpack.c.b16 %v376, %v375
      %v399 = vpack.c.b16 %v378, %v377
      %v400 = vpack.c.b16 %v380, %v379
      %v401 = vpack.c.b16 %v382, %v381
      %v402 = vpack.c.b16 %v384, %v383
      %v403 = vpack.c.b16 %v386, %v385
      %v404 = vpack.c.b16 %v388, %v387
      %vm405 = vcmask 31744
      %v407 = vsel %vm405, %v389, 0
      %v410 = vsel %vm405, %v390, 0
      %v413 = vsel %vm405, %v391, 0
      %v416 = vsel %vm405, %v392, 0
      %v419 = vsel %vm405, %v393, 0
      %v422 = vsel %vm405, %v394, 0
      %v425 = vsel %vm405, %v395, 0
      %v428 = vsel %vm405, %v396, 0
      %v431 = vsel %vm405, %v397, 0
      %v434 = vsel %vm405, %v398, 0
      %v437 = vsel %vm405, %v399, 0
      %v440 = vsel %vm405, %v400, 0
      %v443 = vsel %vm405, %v401, 0
      %v446 = vsel %vm405, %v402, 0
      %v449 = vsel %vm405, %v403, 0
      %v452 = vsel %vm405, %v404, 0
      %vm454 = vcmask 1041408
      %v456 = vsel %vm454, %v324, 0
      %458 = vmatprep.subr.bf16.mxu0 0
      %459 = vmatpush1.bf16.msra.mxu0 0
      %460 = vmatprep.subr.bf16.mxu0 0
      %461 = vmatpush1.bf16.msra.mxu0 0
      %462 = vmatprep.subr.bf16.mxu0 0
      %463 = vmatpush1.bf16.msra.mxu0 0
      %464 = vmatprep.subr.bf16.mxu0 0
      %465 = vmatpush1.bf16.msra.mxu0 0
      %466 = vmatprep.subr.bf16.mxu0 0
      %467 = vmatpush1.bf16.msra.mxu0 0
      %468 = vmatprep.subr.bf16.mxu0 0
      %469 = vmatpush1.bf16.msra.mxu0 0
      %470 = vmatprep.subr.bf16.mxu0 0
      %471 = vmatpush1.bf16.msra.mxu0 0
      %472 = vmatprep.subr.bf16.mxu0 0
      %473 = vmatpush1.bf16.msra.mxu0 %v456
      %474 = vmatprep.subr.bf16.mxu0 0
      %475 = vmatpush2.bf16.msra.mxu0 0
      %476 = vmatprep.subr.bf16.mxu0 0
      %477 = vmatpush2.bf16.msra.mxu0 0
      %478 = vmatprep.subr.bf16.mxu0 0
      %479 = vmatpush2.bf16.msra.mxu0 0
      %480 = vmatprep.subr.bf16.mxu0 0
      %481 = vmatpush2.bf16.msra.mxu0 0
      %482 = vmatprep.subr.bf16.mxu0 0
      %483 = vmatpush2.bf16.msra.mxu0 0
      %484 = vmatprep.subr.bf16.mxu0 0
      %485 = vmatpush2.bf16.msra.mxu0 0
      %486 = vmatprep.subr.bf16.mxu0 0
      %487 = vmatpush2.bf16.msra.mxu0 0
      %488 = vmatprep.subr.bf16.mxu0 0
      %489 = vmatpush2.bf16.msra.mxu0 0
      %490 = vmatprep.mubr.bf16.mxu0 0
      %491 = vmatmul.mubr.bf16.gmra.mxu0 %v407
      %v492 = vpop.f32.mrf.mxu0
      %v493 = vadd.f32 0.0, %v492
      %v494 = vpop.f32.mrf.mxu0
      %v495 = vpop.f32.mrf.mxu0
      %v496 = vadd.f32 0.0, %v495
      %v497 = vpop.f32.mrf.mxu0
      %498 = vmatprep.mubr.bf16.mxu0 0
      %499 = vmatmul.mubr.bf16.gmra.mxu0 %v410
      %v500 = vpop.f32.mrf.mxu0
      %v501 = vadd.f32 0.0, %v500
      %v502 = vpop.f32.mrf.mxu0
      %v503 = vpop.f32.mrf.mxu0
      %v504 = vadd.f32 0.0, %v503
      %v505 = vpop.f32.mrf.mxu0
      %506 = vmatprep.mubr.bf16.mxu0 0
      %507 = vmatmul.mubr.bf16.gmra.mxu0 %v413
      %v508 = vpop.f32.mrf.mxu0
      %v509 = vadd.f32 0.0, %v508
      %v510 = vpop.f32.mrf.mxu0
      %v511 = vpop.f32.mrf.mxu0
      %v512 = vadd.f32 0.0, %v511
      %v513 = vpop.f32.mrf.mxu0
      %514 = vmatprep.mubr.bf16.mxu0 0
      %515 = vmatmul.mubr.bf16.gmra.mxu0 %v416
      %v516 = vpop.f32.mrf.mxu0
      %v517 = vadd.f32 0.0, %v516
      %v518 = vpop.f32.mrf.mxu0
      %v519 = vpop.f32.mrf.mxu0
      %v520 = vadd.f32 0.0, %v519
      %v521 = vpop.f32.mrf.mxu0
      %522 = vmatprep.mubr.bf16.mxu0 0
      %523 = vmatmul.mubr.bf16.gmra.mxu0 %v419
      %v524 = vpop.f32.mrf.mxu0
      %v525 = vadd.f32 0.0, %v524
      %v526 = vpop.f32.mrf.mxu0
      %v527 = vpop.f32.mrf.mxu0
      %v528 = vadd.f32 0.0, %v527
      %v529 = vpop.f32.mrf.mxu0
      %530 = vmatprep.mubr.bf16.mxu0 0
      %531 = vmatmul.mubr.bf16.gmra.mxu0 %v422
      %v532 = vpop.f32.mrf.mxu0
      %v533 = vadd.f32 0.0, %v532
      %v534 = vpop.f32.mrf.mxu0
      %v535 = vpop.f32.mrf.mxu0
      %v536 = vadd.f32 0.0, %v535
      %v537 = vpop.f32.mrf.mxu0
      %538 = vmatprep.mubr.bf16.mxu0 0
      %539 = vmatmul.mubr.bf16.gmra.mxu0 %v425
      %v540 = vpop.f32.mrf.mxu0
      %v541 = vadd.f32 0.0, %v540
      %v542 = vpop.f32.mrf.mxu0
      %v543 = vpop.f32.mrf.mxu0
      %v544 = vadd.f32 0.0, %v543
      %v545 = vpop.f32.mrf.mxu0
      %546 = vmatprep.mubr.bf16.mxu0 0
      %547 = vmatmul.mubr.bf16.gmra.mxu0 %v428
      %v548 = vpop.f32.mrf.mxu0
      %v549 = vadd.f32 0.0, %v548
      %v550 = vpop.f32.mrf.mxu0
      %v551 = vpop.f32.mrf.mxu0
      %v552 = vadd.f32 0.0, %v551
      %v553 = vpop.f32.mrf.mxu0
      %554 = vmatprep.mubr.bf16.mxu0 0
      %555 = vmatmul.mubr.bf16.gmra.mxu0 %v431
      %v556 = vpop.f32.mrf.mxu0
      %v557 = vadd.f32 0.0, %v556
      %v558 = vpop.f32.mrf.mxu0
      %v559 = vpop.f32.mrf.mxu0
      %v560 = vadd.f32 0.0, %v559
      %v561 = vpop.f32.mrf.mxu0
      %562 = vmatprep.mubr.bf16.mxu0 0
      %563 = vmatmul.mubr.bf16.gmra.mxu0 %v434
      %v564 = vpop.f32.mrf.mxu0
      %v565 = vadd.f32 0.0, %v564
      %v566 = vpop.f32.mrf.mxu0
      %v567 = vpop.f32.mrf.mxu0
      %v568 = vadd.f32 0.0, %v567
      %v569 = vpop.f32.mrf.mxu0
      %570 = vmatprep.mubr.bf16.mxu0 0
      %571 = vmatmul.mubr.bf16.gmra.mxu0 %v437
      %v572 = vpop.f32.mrf.mxu0
      %v573 = vadd.f32 0.0, %v572
      %v574 = vpop.f32.mrf.mxu0
      %v575 = vpop.f32.mrf.mxu0
      %v576 = vadd.f32 0.0, %v575
      %v577 = vpop.f32.mrf.mxu0
      %578 = vmatprep.mubr.bf16.mxu0 0
      %579 = vmatmul.mubr.bf16.gmra.mxu0 %v440
      %v580 = vpop.f32.mrf.mxu0
      %v581 = vadd.f32 0.0, %v580
      %v582 = vpop.f32.mrf.mxu0
      %v583 = vpop.f32.mrf.mxu0
      %v584 = vadd.f32 0.0, %v583
      %v585 = vpop.f32.mrf.mxu0
      %586 = vmatprep.mubr.bf16.mxu0 0
      %587 = vmatmul.mubr.bf16.gmra.mxu0 %v443
      %v588 = vpop.f32.mrf.mxu0
      %v589 = vadd.f32 0.0, %v588
      %v590 = vpop.f32.mrf.mxu0
      %v591 = vpop.f32.mrf.mxu0
      %v592 = vadd.f32 0.0, %v591
      %v593 = vpop.f32.mrf.mxu0
      %594 = vmatprep.mubr.bf16.mxu0 0
      %595 = vmatmul.mubr.bf16.gmra.mxu0 %v446
      %v596 = vpop.f32.mrf.mxu0
      %v597 = vadd.f32 0.0, %v596
      %v598 = vpop.f32.mrf.mxu0
      %v599 = vpop.f32.mrf.mxu0
      %v600 = vadd.f32 0.0, %v599
      %v601 = vpop.f32.mrf.mxu0
      %602 = vmatprep.mubr.bf16.mxu0 0
      %603 = vmatmul.mubr.bf16.gmra.mxu0 %v449
      %v604 = vpop.f32.mrf.mxu0
      %v605 = vadd.f32 0.0, %v604
      %v606 = vpop.f32.mrf.mxu0
      %v607 = vpop.f32.mrf.mxu0
      %v608 = vadd.f32 0.0, %v607
      %v609 = vpop.f32.mrf.mxu0
      %610 = vmatprep.mubr.bf16.mxu0 0
      %611 = vmatmul.mubr.bf16.gmra.mxu0 %v452
      %v612 = vpop.f32.mrf.mxu0
      %v613 = vadd.f32 0.0, %v612
      %v614 = vpop.f32.mrf.mxu0
      %v615 = vpop.f32.mrf.mxu0
      %v616 = vadd.f32 0.0, %v615
      %v617 = vpop.f32.mrf.mxu0
      %618 = vdwg.mxu0
      %v651 = vunpack.c.l.b16 %v251
      %v652 = vunpack.c.l.b16 %v252
      %v653 = vunpack.c.l.b16 %v253
      %v654 = vunpack.c.l.b16 %v254
      %v655 = vunpack.c.l.b16 %v255
      %v656 = vunpack.c.l.b16 %v256
      %v657 = vunpack.c.l.b16 %v257
      %v658 = vunpack.c.l.b16 %v258
      %v659 = vunpack.c.l.b16 %v259
      %v660 = vunpack.c.l.b16 %v260
      %v661 = vunpack.c.l.b16 %v261
      %v662 = vunpack.c.l.b16 %v262
      %v663 = vunpack.c.l.b16 %v263
      %v664 = vunpack.c.l.b16 %v264
      %v665 = vunpack.c.l.b16 %v265
      %v666 = vunpack.c.l.b16 %v266
      %v667 = vunpack.c.l.b16 %v267
      %v668 = vunpack.c.l.b16 %v268
      %v669 = vunpack.c.l.b16 %v269
      %v670 = vunpack.c.l.b16 %v270
      %v671 = vunpack.c.l.b16 %v271
      %v672 = vunpack.c.l.b16 %v272
      %v673 = vunpack.c.l.b16 %v273
      %v674 = vunpack.c.l.b16 %v274
      %v675 = vunpack.c.l.b16 %v275
      %v676 = vunpack.c.l.b16 %v276
      %v677 = vunpack.c.l.b16 %v277
      %v678 = vunpack.c.l.b16 %v278
      %v679 = vunpack.c.l.b16 %v279
      %v680 = vunpack.c.l.b16 %v280
      %v681 = vunpack.c.l.b16 %v281
      %v682 = vunpack.c.l.b16 %v282
      %v683 = vpack.c.b16 %v652, %v651
      %v684 = vpack.c.b16 %v654, %v653
      %v685 = vpack.c.b16 %v656, %v655
      %v686 = vpack.c.b16 %v658, %v657
      %v687 = vpack.c.b16 %v660, %v659
      %v688 = vpack.c.b16 %v662, %v661
      %v689 = vpack.c.b16 %v664, %v663
      %v690 = vpack.c.b16 %v666, %v665
      %v691 = vpack.c.b16 %v668, %v667
      %v692 = vpack.c.b16 %v670, %v669
      %v693 = vpack.c.b16 %v672, %v671
      %v694 = vpack.c.b16 %v674, %v673
      %v695 = vpack.c.b16 %v676, %v675
      %v696 = vpack.c.b16 %v678, %v677
      %v697 = vpack.c.b16 %v680, %v679
      %v698 = vpack.c.b16 %v682, %v681
      %v708 = vunpack.c.l.b16 %v283
      %v709 = vunpack.c.l.b16 %v284
      %v710 = vunpack.c.l.b16 %v285
      %v711 = vunpack.c.l.b16 %v286
      %v712 = vunpack.c.l.b16 %v287
      %v713 = vunpack.c.l.b16 %v288
      %v714 = vunpack.c.l.b16 %v289
      %v715 = vunpack.c.l.b16 %v290
      %v716 = vunpack.c.l.b16 %v291
      %v717 = vpack.c.b16 %v709, %v708
      %v718 = vpack.c.b16 %v711, %v710
      %v719 = vpack.c.b16 %v713, %v712
      %v720 = vpack.c.b16 %v715, %v714
      %v721 = vpack.c.b16 %v716, %v716
      %vm726 = vcmask 588800
      %v728 = vsel %vm726, %v683, 0
      %v731 = vsel %vm726, %v684, 0
      %v734 = vsel %vm726, %v685, 0
      %v737 = vsel %vm726, %v686, 0
      %v740 = vsel %vm726, %v687, 0
      %v743 = vsel %vm726, %v688, 0
      %v746 = vsel %vm726, %v689, 0
      %v749 = vsel %vm726, %v690, 0
      %v752 = vsel %vm726, %v691, 0
      %v755 = vsel %vm726, %v692, 0
      %v758 = vsel %vm726, %v693, 0
      %v761 = vsel %vm726, %v694, 0
      %v764 = vsel %vm726, %v695, 0
      %v767 = vsel %vm726, %v696, 0
      %v770 = vsel %vm726, %v697, 0
      %v773 = vsel %vm726, %v698, 0
      %vm775 = vcmask 1043456
      %v777 = vsel %vm775, %v721, 0
      %779 = vmatprep.subr.bf16.mxu0 0
      %780 = vmatpush1.bf16.msra.mxu0 0
      %781 = vmatprep.subr.bf16.mxu0 0
      %782 = vmatpush1.bf16.msra.mxu0 0
      %783 = vmatprep.subr.bf16.mxu0 0
      %784 = vmatpush1.bf16.msra.mxu0 0
      %785 = vmatprep.subr.bf16.mxu0 0
      %786 = vmatpush1.bf16.msra.mxu0 %v777
      %787 = vmatprep.subr.bf16.mxu0 0
      %788 = vmatpush1.bf16.msra.mxu0 %v720
      %789 = vmatprep.subr.bf16.mxu0 0
      %790 = vmatpush1.bf16.msra.mxu0 %v719
      %791 = vmatprep.subr.bf16.mxu0 0
      %792 = vmatpush1.bf16.msra.mxu0 %v718
      %793 = vmatprep.subr.bf16.mxu0 0
      %794 = vmatpush1.bf16.msra.mxu0 %v717
      %795 = vmatprep.subr.bf16.mxu0 0
      %796 = vmatpush2.bf16.msra.mxu0 0
      %797 = vmatprep.subr.bf16.mxu0 0
      %798 = vmatpush2.bf16.msra.mxu0 0
      %799 = vmatprep.subr.bf16.mxu0 0
      %800 = vmatpush2.bf16.msra.mxu0 0
      %801 = vmatprep.subr.bf16.mxu0 0
      %802 = vmatpush2.bf16.msra.mxu0 0
      %803 = vmatprep.subr.bf16.mxu0 0
      %804 = vmatpush2.bf16.msra.mxu0 0
      %805 = vmatprep.subr.bf16.mxu0 0
      %806 = vmatpush2.bf16.msra.mxu0 0
      %807 = vmatprep.subr.bf16.mxu0 0
      %808 = vmatpush2.bf16.msra.mxu0 0
      %809 = vmatprep.subr.bf16.mxu0 0
      %810 = vmatpush2.bf16.msra.mxu0 0
      %811 = vmatprep.mubr.bf16.mxu0 0
      %812 = vmatmul.mubr.bf16.gmra.mxu0 %v728
      %v813 = vpop.f32.mrf.mxu0
      %v814 = vadd.f32 %v493, %v813
      %v815 = vpop.f32.mrf.mxu0
      %v816 = vpop.f32.mrf.mxu0
      %v817 = vadd.f32 %v496, %v816
      %v818 = vpop.f32.mrf.mxu0
      %819 = vmatprep.mubr.bf16.mxu0 0
      %820 = vmatmul.mubr.bf16.gmra.mxu0 %v731
      %v821 = vpop.f32.mrf.mxu0
      %v822 = vadd.f32 %v501, %v821
      %v823 = vpop.f32.mrf.mxu0
      %v824 = vpop.f32.mrf.mxu0
      %v825 = vadd.f32 %v504, %v824
      %v826 = vpop.f32.mrf.mxu0
      %827 = vmatprep.mubr.bf16.mxu0 0
      %828 = vmatmul.mubr.bf16.gmra.mxu0 %v734
      %v829 = vpop.f32.mrf.mxu0
      %v830 = vadd.f32 %v509, %v829
      %v831 = vpop.f32.mrf.mxu0
      %v832 = vpop.f32.mrf.mxu0
      %v833 = vadd.f32 %v512, %v832
      %v834 = vpop.f32.mrf.mxu0
      %835 = vmatprep.mubr.bf16.mxu0 0
      %836 = vmatmul.mubr.bf16.gmra.mxu0 %v737
      %v837 = vpop.f32.mrf.mxu0
      %v838 = vadd.f32 %v517, %v837
      %v839 = vpop.f32.mrf.mxu0
      %v840 = vpop.f32.mrf.mxu0
      %v841 = vadd.f32 %v520, %v840
      %v842 = vpop.f32.mrf.mxu0
      %843 = vmatprep.mubr.bf16.mxu0 0
      %844 = vmatmul.mubr.bf16.gmra.mxu0 %v740
      %v845 = vpop.f32.mrf.mxu0
      %v846 = vadd.f32 %v525, %v845
      %v847 = vpop.f32.mrf.mxu0
      %v848 = vpop.f32.mrf.mxu0
      %v849 = vadd.f32 %v528, %v848
      %v850 = vpop.f32.mrf.mxu0
      %851 = vmatprep.mubr.bf16.mxu0 0
      %852 = vmatmul.mubr.bf16.gmra.mxu0 %v743
      %v853 = vpop.f32.mrf.mxu0
      %v854 = vadd.f32 %v533, %v853
      %v855 = vpop.f32.mrf.mxu0
      %v856 = vpop.f32.mrf.mxu0
      %v857 = vadd.f32 %v536, %v856
      %v858 = vpop.f32.mrf.mxu0
      %859 = vmatprep.mubr.bf16.mxu0 0
      %860 = vmatmul.mubr.bf16.gmra.mxu0 %v746
      %v861 = vpop.f32.mrf.mxu0
      %v862 = vadd.f32 %v541, %v861
      %v863 = vpop.f32.mrf.mxu0
      %v864 = vpop.f32.mrf.mxu0
      %v865 = vadd.f32 %v544, %v864
      %v866 = vpop.f32.mrf.mxu0
      %867 = vmatprep.mubr.bf16.mxu0 0
      %868 = vmatmul.mubr.bf16.gmra.mxu0 %v749
      %v869 = vpop.f32.mrf.mxu0
      %v870 = vadd.f32 %v549, %v869
      %v871 = vpop.f32.mrf.mxu0
      %v872 = vpop.f32.mrf.mxu0
      %v873 = vadd.f32 %v552, %v872
      %v874 = vpop.f32.mrf.mxu0
      %875 = vmatprep.mubr.bf16.mxu0 0
      %876 = vmatmul.mubr.bf16.gmra.mxu0 %v752
      %v877 = vpop.f32.mrf.mxu0
      %v878 = vadd.f32 %v557, %v877
      %v879 = vpop.f32.mrf.mxu0
      %v880 = vpop.f32.mrf.mxu0
      %v881 = vadd.f32 %v560, %v880
      %v882 = vpop.f32.mrf.mxu0
      %883 = vmatprep.mubr.bf16.mxu0 0
      %884 = vmatmul.mubr.bf16.gmra.mxu0 %v755
      %v885 = vpop.f32.mrf.mxu0
      %v886 = vadd.f32 %v565, %v885
      %v887 = vpop.f32.mrf.mxu0
      %v888 = vpop.f32.mrf.mxu0
      %v889 = vadd.f32 %v568, %v888
      %v890 = vpop.f32.mrf.mxu0
      %891 = vmatprep.mubr.bf16.mxu0 0
      %892 = vmatmul.mubr.bf16.gmra.mxu0 %v758
      %v893 = vpop.f32.mrf.mxu0
      %v894 = vadd.f32 %v573, %v893
      %v895 = vpop.f32.mrf.mxu0
      %v896 = vpop.f32.mrf.mxu0
      %v897 = vadd.f32 %v576, %v896
      %v898 = vpop.f32.mrf.mxu0
      %899 = vmatprep.mubr.bf16.mxu0 0
      %900 = vmatmul.mubr.bf16.gmra.mxu0 %v761
      %v901 = vpop.f32.mrf.mxu0
      %v902 = vadd.f32 %v581, %v901
      %v903 = vpop.f32.mrf.mxu0
      %v904 = vpop.f32.mrf.mxu0
      %v905 = vadd.f32 %v584, %v904
      %v906 = vpop.f32.mrf.mxu0
      %907 = vmatprep.mubr.bf16.mxu0 0
      %908 = vmatmul.mubr.bf16.gmra.mxu0 %v764
      %v909 = vpop.f32.mrf.mxu0
      %v910 = vadd.f32 %v589, %v909
      %v911 = vpop.f32.mrf.mxu0
      %v912 = vpop.f32.mrf.mxu0
      %v913 = vadd.f32 %v592, %v912
      %v914 = vpop.f32.mrf.mxu0
      %915 = vmatprep.mubr.bf16.mxu0 0
      %916 = vmatmul.mubr.bf16.gmra.mxu0 %v767
      %v917 = vpop.f32.mrf.mxu0
      %v918 = vadd.f32 %v597, %v917
      %v919 = vpop.f32.mrf.mxu0
      %v920 = vpop.f32.mrf.mxu0
      %v921 = vadd.f32 %v600, %v920
      %v922 = vpop.f32.mrf.mxu0
      %923 = vmatprep.mubr.bf16.mxu0 0
      %924 = vmatmul.mubr.bf16.gmra.mxu0 %v770
      %v925 = vpop.f32.mrf.mxu0
      %v926 = vadd.f32 %v605, %v925
      %v927 = vpop.f32.mrf.mxu0
      %v928 = vpop.f32.mrf.mxu0
      %v929 = vadd.f32 %v608, %v928
      %v930 = vpop.f32.mrf.mxu0
      %931 = vmatprep.mubr.bf16.mxu0 0
      %932 = vmatmul.mubr.bf16.gmra.mxu0 %v773
      %v933 = vpop.f32.mrf.mxu0
      %v934 = vadd.f32 %v613, %v933
      %v935 = vpop.f32.mrf.mxu0
      %v936 = vpop.f32.mrf.mxu0
      %v937 = vadd.f32 %v616, %v936
      %v938 = vpop.f32.mrf.mxu0
      %939 = vdwg.mxu0
      %v940 = vld [vmem:[%s4] sm:$0x1]
      %v942 = vlaneseq
      %v943 = vshrl.u32 %v942, 7
      %v944 = vsub.s32 0, %v943
      %v945 = vrot.slane %v940, %v944
      %v947 = vadd.f32 %v814, %v945
      %v948 = vadd.f32 %v817, %v945
      %v949 = vadd.f32 %v822, %v945
      %v950 = vadd.f32 %v825, %v945
      %v951 = vadd.f32 %v830, %v945
      %v952 = vadd.f32 %v833, %v945
      %v953 = vadd.f32 %v838, %v945
      %v954 = vadd.f32 %v841, %v945
      %v955 = vadd.f32 %v846, %v945
      %v956 = vadd.f32 %v849, %v945
      %v957 = vadd.f32 %v854, %v945
      %v958 = vadd.f32 %v857, %v945
      %v959 = vadd.f32 %v862, %v945
      %v960 = vadd.f32 %v865, %v945
      %v961 = vadd.f32 %v870, %v945
      %v962 = vadd.f32 %v873, %v945
      %v963 = vadd.f32 %v878, %v945
      %v964 = vadd.f32 %v881, %v945
      %v965 = vadd.f32 %v886, %v945
      %v966 = vadd.f32 %v889, %v945
      %v967 = vadd.f32 %v894, %v945
      %v968 = vadd.f32 %v897, %v945
      %v969 = vadd.f32 %v902, %v945
      %v970 = vadd.f32 %v905, %v945
      %v971 = vadd.f32 %v910, %v945
      %v972 = vadd.f32 %v913, %v945
      %v973 = vadd.f32 %v918, %v945
      %v974 = vadd.f32 %v921, %v945
      %v975 = vadd.f32 %v926, %v945
      %v976 = vadd.f32 %v929, %v945
      %v977 = vadd.f32 %v934, %v945
      %v978 = vadd.f32 %v937, %v945
      %vm979 = vcmask 64512
      %980 = vst.msk [vmem:[%s248] sm:$0xff] %vm979, %v947
      %981 = vst.msk [vmem:[%s248 + $0x8] sm:$0xff] %vm979, %v948
      %982 = vst.msk [vmem:[%s248 + $0x10] sm:$0xff] %vm979, %v949
      %983 = vst.msk [vmem:[%s248 + $0x18] sm:$0xff] %vm979, %v950
      %984 = vst.msk [vmem:[%s248 + $0x20] sm:$0xff] %vm979, %v951
      %985 = vst.msk [vmem:[%s248 + $0x28] sm:$0xff] %vm979, %v952
      %986 = vst.msk [vmem:[%s248 + $0x30] sm:$0xff] %vm979, %v953
      %987 = vst.msk [vmem:[%s248 + $0x38] sm:$0xff] %vm979, %v954
      %988 = vst.msk [vmem:[%s248 + $0x40] sm:$0xff] %vm979, %v955
      %989 = vst.msk [vmem:[%s248 + $0x48] sm:$0xff] %vm979, %v956
      %990 = vst.msk [vmem:[%s248 + $0x50] sm:$0xff] %vm979, %v957
      %991 = vst.msk [vmem:[%s248 + $0x58] sm:$0xff] %vm979, %v958
      %992 = vst.msk [vmem:[%s248 + $0x60] sm:$0xff] %vm979, %v959
      %993 = vst.msk [vmem:[%s248 + $0x68] sm:$0xff] %vm979, %v960
      %994 = vst.msk [vmem:[%s248 + $0x70] sm:$0xff] %vm979, %v961
      %995 = vst.msk [vmem:[%s248 + $0x78] sm:$0xff] %vm979, %v962
      %996 = vst.msk [vmem:[%s248 + $0x80] sm:$0xff] %vm979, %v963
      %997 = vst.msk [vmem:[%s248 + $0x88] sm:$0xff] %vm979, %v964
      %998 = vst.msk [vmem:[%s248 + $0x90] sm:$0xff] %vm979, %v965
      %999 = vst.msk [vmem:[%s248 + $0x98] sm:$0xff] %vm979, %v966
      %1000 = vst.msk [vmem:[%s248 + $0xa0] sm:$0xff] %vm979, %v967
      %1001 = vst.msk [vmem:[%s248 + $0xa8] sm:$0xff] %vm979, %v968
      %1002 = vst.msk [vmem:[%s248 + $0xb0] sm:$0xff] %vm979, %v969
      %1003 = vst.msk [vmem:[%s248 + $0xb8] sm:$0xff] %vm979, %v970
      %1004 = vst.msk [vmem:[%s248 + $0xc0] sm:$0xff] %vm979, %v971
      %1005 = vst.msk [vmem:[%s248 + $0xc8] sm:$0xff] %vm979, %v972
      %1006 = vst.msk [vmem:[%s248 + $0xd0] sm:$0xff] %vm979, %v973
      %1007 = vst.msk [vmem:[%s248 + $0xd8] sm:$0xff] %vm979, %v974
      %1008 = vst.msk [vmem:[%s248 + $0xe0] sm:$0xff] %vm979, %v975
      %1009 = vst.msk [vmem:[%s248 + $0xe8] sm:$0xff] %vm979, %v976
      %1010 = vst.msk [vmem:[%s248 + $0xf0] sm:$0xff] %vm979, %v977
      %1011 = vst.msk [vmem:[%s248 + $0xf8] sm:$0xff] %vm979, %v978
      %s1012 = smul.u32 32, %s16
      %p1013 = scmp.lt.s32.totalorder %s1012, 63
      %s1014 = scalar_select %p1013, %s1012, 63
      %s1015 = smul.addr %s1014, 8
      %s1016 = scalar_lea.vmem %s5, %s1015
      // Predicated region
      $region41: #{resnet_block_forward.3} parent=39 // pred_check
        %p1017 = pneg %p149
      $region42: #{resnet_block_forward.3} parent=39 // pred_check_branch
        %1019 = sbr.rel (%p1017) target = $region44
      $region43: #{resnet_block_forward.3} parent=39 // pred_region
        %s1020 = smul.u32 32, %s16
      $region44: #{resnet_block_forward.3} parent=39 // pred_fallthru
        _
    $region40: #{resnet_block_forward.3} parent=5 // pred_fallthru
      _
    %p1021 = scmp.le.s32.totalorder 2, %s11
    // Predicated region
    $region45: #{resnet_block_forward.3} parent=5 // pred_check
      %p1022 = pneg %p1021
    $region46: #{resnet_block_forward.3} parent=5 // pred_check_branch
      %1024 = sbr.rel (%p1022) target = $region48
    $region47: #{resnet_block_forward.3} parent=5 // pred_region
      %s1025 = ssub.s32 %s11, 2
      // Predicated region
      $region49: #{resnet_block_forward.3} parent=47 // pred_check
        %p1026 = pneg %p155
      $region50: #{resnet_block_forward.3} parent=47 // pred_check_branch
        %1028 = sbr.rel (%p1026) target = $region52
      $region51: #{resnet_block_forward.3} parent=47 // pred_region
        %s1029 = smul.u32 32, %s17
        %p1030 = scmp.lt.s32.totalorder %s1029, 63
        %s1031 = scalar_select %p1030, %s1029, 63
        %s1032 = smul.addr %s1031, 8
        %s1033 = scalar_lea.vmem %s5, %s1032
      $region52: #{resnet_block_forward.3} parent=47 // pred_fallthru
        _
    $region48: #{resnet_block_forward.3} parent=5 // pred_fallthru
      _
  $region6: #{resnet_block_forward.3} parent=0 // loop_footer
    %s15 = sadd.s32 1, %s11
  $region7: #{resnet_block_forward.3} parent=0 // loop_footer_branch
    %10 = sbr.rel target = $region3
  $region8: #{resnet_block_forward.3} parent=0 // loop_exit
    _

</llo_original>
